<compile_context>
chip_gen: v6e
topology: v6e:2x2x1
jax: 0.10.0
libtpu: 0.0.40
codegen_flags: <defaults>
</compile_context>

<pallas_src>
import functools

import jax
import jax.numpy as jnp
from jax import lax
from jax.experimental import pallas as pl
from jax.experimental.pallas import tpu as pltpu


# ----------------------------------------------------------------------------
# Fused kernel: per (batch block, time chunk):
#   1) gx = x_chunk @ W_ih^T + (b_ih + b_hh)   (one MXU matmul, off the serial path)
#   2) serial LSTM recurrence over the chunk's timesteps (h/c in registers)
#   3) at the final time chunk: out = h_last @ W_out^T + b_out  (lane-dense 128-pad tile)
def _lstm_fused_kernel(x_ref, wih_ref, bg_ref, whh_ref, wout_ref, bout_ref,
                       out_ref, gx_scr, h_scr, c_scr, *, unroll):
    chunk = pl.program_id(1)                      # time-chunk index (serial axis)
    t_chunk, tb, E = x_ref.shape
    H = whh_ref.shape[0]

    @pl.when(chunk == 0)
    def _init():
        h_scr[...] = jnp.zeros_like(h_scr)
        c_scr[...] = jnp.zeros_like(c_scr)

    # Input projection for the whole chunk: bf16 MXU operands, f32 accumulation.
    x_flat = x_ref[...].reshape(t_chunk * tb, E)                       # bf16, leading-dim merge
    gx = (jnp.dot(x_flat, wih_ref[...], preferred_element_type=jnp.float32)
          + bg_ref[...])                                               # (t_chunk*tb, 4H) f32
    gx_scr[...] = gx.reshape(t_chunk, tb, 4 * H)                       # stays in VMEM

    def sigmoid(v):
        # One EUP (tanh) push instead of exp + reciprocal; exact identity.
        return 0.5 * (jnp.tanh(0.5 * v) + 1.0)

    def step(t, carry):
        h, c = carry                                                   # f32 register state
        # Single MXU push per timestep on the serial path.
        gates = (jnp.dot(h.astype(whh_ref.dtype), whh_ref[...],
                         preferred_element_type=jnp.float32)
                 + gx_scr[t])                                          # (tb, 4H) f32
        # PyTorch gate order [i, f, g, o]; H multiple of 128 keeps slices lane-aligned.
        i_g = sigmoid(gates[:, 0 * H:1 * H])
        f_g = sigmoid(gates[:, 1 * H:2 * H])
        g_g = jnp.tanh(gates[:, 2 * H:3 * H])
        o_g = sigmoid(gates[:, 3 * H:4 * H])
        c_new = f_g * c + i_g * g_g
        h_new = o_g * jnp.tanh(c_new)
        return h_new, c_new

    h, c = lax.fori_loop(0, t_chunk, step, (h_scr[...], c_scr[...]), unroll=unroll)
    h_scr[...] = h
    c_scr[...] = c

    @pl.when(chunk == pl.num_programs(1) - 1)
    def _finalize():
        # Output projection of the last hidden state; lane-dense (128-padded) store.
        out_ref[...] = (jnp.dot(h, wout_ref[...], preferred_element_type=jnp.float32)
                        + bout_ref[...])


# ----------------------------------------------------------------------------
def _vmem_budget_bytes():
    # Per-chip budget (v7x has only 64 MiB physical VMEM; v5e/v6e have 128 MiB).
    try:
        cap = getattr(pltpu.get_tpu_info(), "vmem_capacity_bytes", None)
    except Exception:
        cap = None
    if not cap:
        cap = 64 * 1024 * 1024      # conservative fallback = v7x physical VMEM
    return int(cap * 3 // 4)


def _pick_batch_tile(b_pad):
    for tb in (128, 64, 32, 16, 8):
        if b_pad % tb == 0:
            return tb
    return b_pad


def _pick_time_chunk(T, tb, H, E, vmem_budget):
    # Per timestep inside a chunk: 2x double-buffered bf16 x rows + f32 gate scratch rows.
    per_step = 2 * tb * E * 2 + tb * 4 * H * 4
    t_max = max(1, (vmem_budget // 4) // max(per_step, 1))
    t_chunk = min(T, 32, t_max)
    while T % t_chunk:              # keep the grid exact for small demo sizes
        t_chunk -= 1
    return max(t_chunk, 1)


def lstm_model_forward(tokens, params):
    """tokens: (B, T) int32. Matches PyTorch: out(h_T).squeeze()."""
    emb = params["embedding"]        # (V, E)   bf16
    w_ih_t = params["w_ih_t"]        # (E, 4H)  bf16
    w_hh_t = params["w_hh_t"]        # (H, 4H)  bf16
    b_gates = params["b_gates"]      # (1, 4H)  f32
    w_out_t = params["w_out_t"]      # (H, O)   f32
    b_out = params["b_out"]          # (1, O)   f32

    B, T = tokens.shape
    E = emb.shape[1]
    H = w_hh_t.shape[0]
    O = w_out_t.shape[1]
    O_pad = pl.cdiv(O, 128) * 128
    B_pad = pl.cdiv(B, 8) * 8

    # bf16 embedding gather directly into time-major layout (no f32 intermediate,
    # no separate transpose pass). Padded batch rows use token 0 and are sliced off.
    tokens_p = jnp.pad(tokens, ((0, B_pad - B), (0, 0)))
    x_tm = jnp.take(emb, tokens_p.T, axis=0)                 # (T, B_pad, E) bf16

    vmem_budget = _vmem_budget_bytes()
    tb = _pick_batch_tile(B_pad)
    t_chunk = _pick_time_chunk(T, tb, H, E, vmem_budget)
    nb, nc = B_pad // tb, T // t_chunk

    # Bound the unroll by vreg pressure: per-step live set ~ gates (tb,4H) f32 x2
    # (pre-activation + gate slices) + h,c (tb,H) f32.  Full unroll only if it fits
    # comfortably in the 64-vreg file; otherwise unroll=2.
    step_live_bytes = tb * (4 * H) * 4 * 2 + tb * H * 4 * 2
    unroll = True if step_live_bytes <= 16 * 4096 else 2

    w_out_pad = jnp.pad(w_out_t, ((0, 0), (0, O_pad - O)))
    b_out_pad = jnp.pad(b_out, ((0, 0), (0, O_pad - O)))

    out_pad = pl.pallas_call(
        functools.partial(_lstm_fused_kernel, unroll=unroll),
        out_shape=jax.ShapeDtypeStruct((B_pad, O_pad), jnp.float32),
        grid=(nb, nc),
        in_specs=[
            pl.BlockSpec((t_chunk, tb, E), lambda b, c: (c, b, 0)),   # streamed bf16 x chunk
            pl.BlockSpec((E, 4 * H), lambda b, c: (0, 0)),            # resident W_ih^T (bf16)
            pl.BlockSpec((1, 4 * H), lambda b, c: (0, 0)),            # resident b_ih+b_hh (f32)
            pl.BlockSpec((H, 4 * H), lambda b, c: (0, 0)),            # resident W_hh^T (bf16)
            pl.BlockSpec((H, O_pad), lambda b, c: (0, 0)),            # resident W_out^T (f32)
            pl.BlockSpec((1, O_pad), lambda b, c: (0, 0)),            # resident b_out (f32)
        ],
        out_specs=pl.BlockSpec((tb, O_pad), lambda b, c: (b, 0)),     # per-batch-block output
        scratch_shapes=[
            pltpu.VMEM((t_chunk, tb, 4 * H), jnp.float32),            # per-chunk gate pre-acts
            pltpu.VMEM((tb, H), jnp.float32),                         # h across chunks
            pltpu.VMEM((tb, H), jnp.float32),                         # c across chunks
        ],
        compiler_params=pltpu.CompilerParams(
            dimension_semantics=("parallel", "arbitrary"),            # batch parallel, time serial
            vmem_limit_bytes=vmem_budget,
        ),
    )(x_tm, w_ih_t, b_gates, w_hh_t, w_out_pad, b_out_pad)

    # Matches torch .squeeze(): squeezes all unit dims (e.g. output_dim==1 or B==1).
    return jnp.squeeze(out_pad[:B, :O])


def init_params(key, vocab_size, embedding_dim, hidden_dim, output_dim):
    ks = jax.random.split(key, 7)
    scale = 1.0 / jnp.sqrt(hidden_dim)
    emb = jax.random.normal(ks[0], (vocab_size, embedding_dim), jnp.float32)
    w_ih = jax.random.uniform(ks[1], (4 * hidden_dim, embedding_dim),
                              jnp.float32, -scale, scale)
    w_hh = jax.random.uniform(ks[2], (4 * hidden_dim, hidden_dim),
                              jnp.float32, -scale, scale)
    b_ih = jax.random.uniform(ks[3], (4 * hidden_dim,), jnp.float32, -scale, scale)
    b_hh = jax.random.uniform(ks[4], (4 * hidden_dim,), jnp.float32, -scale, scale)
    w_out = jax.random.uniform(ks[5], (output_dim, hidden_dim),
                               jnp.float32, -scale, scale)
    b_out = jax.random.uniform(ks[6], (output_dim,), jnp.float32, -scale, scale)
    return {
        # bf16 MXU operands; accumulation, gate pre-activations and h/c state stay f32.
        # TODO(synk): bf16 weights/embeddings can drift from a f32 PyTorch LSTM over
        # long sequences; keep an f32 reference tolerance test when validating.
        "embedding": emb.astype(jnp.bfloat16),                  # (V, E)  bf16
        "w_ih_t": w_ih.T.astype(jnp.bfloat16),                  # (E, 4H) bf16
        "w_hh_t": w_hh.T.astype(jnp.bfloat16),                  # (H, 4H) bf16
        "b_gates": (b_ih + b_hh).reshape(1, -1),                # (1, 4H) f32
        "w_out_t": w_out.T,                                     # (H, O)  f32
        "b_out": b_out.reshape(1, -1),                          # (1, O)  f32
    }


if __name__ == "__main__":
    # hidden_dim is a multiple of 128 so gate slices and the h/c state are lane-dense.
    vocab_size, embedding_dim, hidden_dim, output_dim = 32, 16, 128, 4
    batch, seq = 2, 8

    key = jax.random.PRNGKey(0)
    k_tok, k_par = jax.random.split(key)
    tokens = jax.random.randint(k_tok, (batch, seq), 0, vocab_size, jnp.int32)
    params = init_params(k_par, vocab_size, embedding_dim, hidden_dim, output_dim)

    out = jax.jit(lstm_model_forward)(tokens, params)
    jax.block_until_ready(out)
    assert out.shape == (batch, output_dim)
    print("KERNEL_OK")
</pallas_src>

<mosaic_0001>
module attributes {stable_mosaic.version = 11 : i64} {
  func.func @_lstm_fused_kernel(%arg0: i32, %arg1: i32, %arg2: memref<8x8x16xbf16, #tpu.memory_space<vmem>>, %arg3: memref<16x512xbf16, #tpu.memory_space<vmem>>, %arg4: memref<1x512xf32, #tpu.memory_space<vmem>>, %arg5: memref<128x512xbf16, #tpu.memory_space<vmem>>, %arg6: memref<128x128xf32, #tpu.memory_space<vmem>>, %arg7: memref<1x128xf32, #tpu.memory_space<vmem>>, %arg8: memref<8x128xf32, #tpu.memory_space<vmem>>, %arg9: memref<8x8x512xf32, #tpu.memory_space<vmem>>, %arg10: memref<8x128xf32, #tpu.memory_space<vmem>>, %arg11: memref<8x128xf32, #tpu.memory_space<vmem>>) attributes {dimension_semantics = [#tpu.dimension_semantics<parallel>, #tpu.dimension_semantics<arbitrary>], iteration_bounds = array<i64: 1, 1>, scalar_prefetch = 0 : i64, scratch_operands = 3 : i64, tpu.core_type = #tpu.core_type<tc>, window_params = [{transform_indices = @transform_0, window_bounds = array<i64: 8, 8, 16>}, {pipeline_mode = #tpu.pipeline_mode<synchronous>, transform_indices = @transform_1, window_bounds = array<i64: 16, 512>}, {pipeline_mode = #tpu.pipeline_mode<synchronous>, transform_indices = @transform_2, window_bounds = array<i64: 1, 512>}, {pipeline_mode = #tpu.pipeline_mode<synchronous>, transform_indices = @transform_3, window_bounds = array<i64: 128, 512>}, {pipeline_mode = #tpu.pipeline_mode<synchronous>, transform_indices = @transform_4, window_bounds = array<i64: 128, 128>}, {pipeline_mode = #tpu.pipeline_mode<synchronous>, transform_indices = @transform_5, window_bounds = array<i64: 1, 128>}, {transform_indices = @transform_6, window_bounds = array<i64: 8, 128>}]} {
    %c0_i32 = arith.constant 0 : i32
    %0 = arith.cmpi eq, %arg1, %c0_i32 : i32
    %1 = arith.extui %0 : i1 to i32
    %c0_i32_0 = arith.constant 0 : i32
    %2 = arith.cmpi ne, %1, %c0_i32_0 : i32
    scf.if %2 {
      %cst_133 = arith.constant 0.000000e+00 : f32
      %323 = vector.broadcast %cst_133 : f32 to vector<8x128xf32>
      %c0_134 = arith.constant 0 : index
      %c0_135 = arith.constant 0 : index
      %324 = vector.load %arg10[%c0_134, %c0_135] : memref<8x128xf32, #tpu.memory_space<vmem>>, vector<8x128xf32>
      tpu.vector_store %arg10[%c0_134, %c0_135], %323 {strides = array<i32>} : memref<8x128xf32, #tpu.memory_space<vmem>>, vector<8x128xf32>,
      %cst_136 = arith.constant 0.000000e+00 : f32
      %325 = vector.broadcast %cst_136 : f32 to vector<8x128xf32>
      %c0_137 = arith.constant 0 : index
      %c0_138 = arith.constant 0 : index
      %326 = vector.load %arg11[%c0_137, %c0_138] : memref<8x128xf32, #tpu.memory_space<vmem>>, vector<8x128xf32>
      tpu.vector_store %arg11[%c0_137, %c0_138], %325 {strides = array<i32>} : memref<8x128xf32, #tpu.memory_space<vmem>>, vector<8x128xf32>,
    } else {
    }
    %c0 = arith.constant 0 : index
    %c0_1 = arith.constant 0 : index
    %c0_2 = arith.constant 0 : index
    %3 = vector.load %arg2[%c0, %c0_1, %c0_2] : memref<8x8x16xbf16, #tpu.memory_space<vmem>>, vector<8x8x16xbf16>
    %4 = vector.shape_cast %3 : vector<8x8x16xbf16> to vector<64x16xbf16>
    %c0_3 = arith.constant 0 : index
    %c0_4 = arith.constant 0 : index
    %5 = vector.load %arg3[%c0_3, %c0_4] : memref<16x512xbf16, #tpu.memory_space<vmem>>, vector<16x512xbf16>
    %cst = arith.constant dense<0.000000e+00> : vector<64x512xf32>
    %6 = tpu.matmul %4, %5, %cst {dimension_numbers = #tpu.dot_dimension_numbers<[1], [0], [0], [1], [0, 0, 1, 1], [], []>} : vector<64x16xbf16>, vector<16x512xbf16>, vector<64x512xf32> -> vector<64x512xf32>
    %c0_5 = arith.constant 0 : index
    %c0_6 = arith.constant 0 : index
    %7 = vector.load %arg4[%c0_5, %c0_6] : memref<1x512xf32, #tpu.memory_space<vmem>>, vector<1x512xf32>
    %8 = vector.broadcast %7 : vector<1x512xf32> to vector<64x512xf32>
    %9 = arith.addf %6, %8 : vector<64x512xf32>
    %10 = vector.shape_cast %9 : vector<64x512xf32> to vector<8x8x512xf32>
    %c0_7 = arith.constant 0 : index
    %c0_8 = arith.constant 0 : index
    %c0_9 = arith.constant 0 : index
    %11 = vector.load %arg9[%c0_7, %c0_8, %c0_9] : memref<8x8x512xf32, #tpu.memory_space<vmem>>, vector<8x8x512xf32>
    tpu.vector_store %arg9[%c0_7, %c0_8, %c0_9], %10 {strides = array<i32>} : memref<8x8x512xf32, #tpu.memory_space<vmem>>, vector<8x8x512xf32>,
    %c0_10 = arith.constant 0 : index
    %c0_11 = arith.constant 0 : index
    %12 = vector.load %arg10[%c0_10, %c0_11] : memref<8x128xf32, #tpu.memory_space<vmem>>, vector<8x128xf32>
    %c0_12 = arith.constant 0 : index
    %c0_13 = arith.constant 0 : index
    %13 = vector.load %arg11[%c0_12, %c0_13] : memref<8x128xf32, #tpu.memory_space<vmem>>, vector<8x128xf32>
    %c0_i32_14 = arith.constant 0 : i32
    %14 = arith.truncf %12 : vector<8x128xf32> to vector<8x128xbf16>
    %c0_15 = arith.constant 0 : index
    %c0_16 = arith.constant 0 : index
    %15 = vector.load %arg5[%c0_15, %c0_16] : memref<128x512xbf16, #tpu.memory_space<vmem>>, vector<128x512xbf16>
    %cst_17 = arith.constant dense<0.000000e+00> : vector<8x512xf32>
    %16 = tpu.matmul %14, %15, %cst_17 {dimension_numbers = #tpu.dot_dimension_numbers<[1], [0], [0], [1], [0, 0, 1, 1], [], []>} : vector<8x128xbf16>, vector<128x512xbf16>, vector<8x512xf32> -> vector<8x512xf32>
    %17 = arith.index_cast %c0_i32_14 : i32 to index
    %c0_18 = arith.constant 0 : index
    %c0_19 = arith.constant 0 : index
    %18 = vector.load %arg9[%17, %c0_18, %c0_19] : memref<8x8x512xf32, #tpu.memory_space<vmem>>, vector<1x8x512xf32>
    %19 = vector.shape_cast %18 : vector<1x8x512xf32> to vector<8x512xf32>
    %20 = arith.addf %16, %19 : vector<8x512xf32>
    %21 = vector.extract_strided_slice %20 {offsets = [0, 0], sizes = [8, 128], strides = [1, 1]} : vector<8x512xf32> to vector<8x128xf32>
    %cst_20 = arith.constant 5.000000e-01 : f32
    %22 = vector.broadcast %cst_20 : f32 to vector<8x128xf32>
    %23 = arith.mulf %22, %21 : vector<8x128xf32>
    %24 = math.tanh %23 : vector<8x128xf32>
    %cst_21 = arith.constant 1.000000e+00 : f32
    %25 = vector.broadcast %cst_21 : f32 to vector<8x128xf32>
    %26 = arith.addf %24, %25 : vector<8x128xf32>
    %cst_22 = arith.constant 5.000000e-01 : f32
    %27 = vector.broadcast %cst_22 : f32 to vector<8x128xf32>
    %28 = arith.mulf %27, %26 : vector<8x128xf32>
    %29 = vector.extract_strided_slice %20 {offsets = [0, 128], sizes = [8, 128], strides = [1, 1]} : vector<8x512xf32> to vector<8x128xf32>
    %cst_23 = arith.constant 5.000000e-01 : f32
    %30 = vector.broadcast %cst_23 : f32 to vector<8x128xf32>
    %31 = arith.mulf %30, %29 : vector<8x128xf32>
    %32 = math.tanh %31 : vector<8x128xf32>
    %cst_24 = arith.constant 1.000000e+00 : f32
    %33 = vector.broadcast %cst_24 : f32 to vector<8x128xf32>
    %34 = arith.addf %32, %33 : vector<8x128xf32>
    %cst_25 = arith.constant 5.000000e-01 : f32
    %35 = vector.broadcast %cst_25 : f32 to vector<8x128xf32>
    %36 = arith.mulf %35, %34 : vector<8x128xf32>
    %37 = vector.extract_strided_slice %20 {offsets = [0, 256], sizes = [8, 128], strides = [1, 1]} : vector<8x512xf32> to vector<8x128xf32>
    %38 = math.tanh %37 : vector<8x128xf32>
    %39 = vector.extract_strided_slice %20 {offsets = [0, 384], sizes = [8, 128], strides = [1, 1]} : vector<8x512xf32> to vector<8x128xf32>
    %cst_26 = arith.constant 5.000000e-01 : f32
    %40 = vector.broadcast %cst_26 : f32 to vector<8x128xf32>
    %41 = arith.mulf %40, %39 : vector<8x128xf32>
    %42 = math.tanh %41 : vector<8x128xf32>
    %cst_27 = arith.constant 1.000000e+00 : f32
    %43 = vector.broadcast %cst_27 : f32 to vector<8x128xf32>
    %44 = arith.addf %42, %43 : vector<8x128xf32>
    %cst_28 = arith.constant 5.000000e-01 : f32
    %45 = vector.broadcast %cst_28 : f32 to vector<8x128xf32>
    %46 = arith.mulf %45, %44 : vector<8x128xf32>
    %47 = arith.mulf %36, %13 : vector<8x128xf32>
    %48 = arith.mulf %28, %38 : vector<8x128xf32>
    %49 = arith.addf %47, %48 : vector<8x128xf32>
    %50 = math.tanh %49 : vector<8x128xf32>
    %51 = arith.mulf %46, %50 : vector<8x128xf32>
    %c1_i32 = arith.constant 1 : i32
    %52 = arith.truncf %51 : vector<8x128xf32> to vector<8x128xbf16>
    %c0_29 = arith.constant 0 : index
    %c0_30 = arith.constant 0 : index
    %53 = vector.load %arg5[%c0_29, %c0_30] : memref<128x512xbf16, #tpu.memory_space<vmem>>, vector<128x512xbf16>
    %cst_31 = arith.constant dense<0.000000e+00> : vector<8x512xf32>
    %54 = tpu.matmul %52, %53, %cst_31 {dimension_numbers = #tpu.dot_dimension_numbers<[1], [0], [0], [1], [0, 0, 1, 1], [], []>} : vector<8x128xbf16>, vector<128x512xbf16>, vector<8x512xf32> -> vector<8x512xf32>
    %55 = arith.index_cast %c1_i32 : i32 to index
    %c0_32 = arith.constant 0 : index
    %c0_33 = arith.constant 0 : index
    %56 = vector.load %arg9[%55, %c0_32, %c0_33] : memref<8x8x512xf32, #tpu.memory_space<vmem>>, vector<1x8x512xf32>
    %57 = vector.shape_cast %56 : vector<1x8x512xf32> to vector<8x512xf32>
    %58 = arith.addf %54, %57 : vector<8x512xf32>
    %59 = vector.extract_strided_slice %58 {offsets = [0, 0], sizes = [8, 128], strides = [1, 1]} : vector<8x512xf32> to vector<8x128xf32>
    %cst_34 = arith.constant 5.000000e-01 : f32
    %60 = vector.broadcast %cst_34 : f32 to vector<8x128xf32>
    %61 = arith.mulf %60, %59 : vector<8x128xf32>
    %62 = math.tanh %61 : vector<8x128xf32>
    %cst_35 = arith.constant 1.000000e+00 : f32
    %63 = vector.broadcast %cst_35 : f32 to vector<8x128xf32>
    %64 = arith.addf %62, %63 : vector<8x128xf32>
    %cst_36 = arith.constant 5.000000e-01 : f32
    %65 = vector.broadcast %cst_36 : f32 to vector<8x128xf32>
    %66 = arith.mulf %65, %64 : vector<8x128xf32>
    %67 = vector.extract_strided_slice %58 {offsets = [0, 128], sizes = [8, 128], strides = [1, 1]} : vector<8x512xf32> to vector<8x128xf32>
    %cst_37 = arith.constant 5.000000e-01 : f32
    %68 = vector.broadcast %cst_37 : f32 to vector<8x128xf32>
    %69 = arith.mulf %68, %67 : vector<8x128xf32>
    %70 = math.tanh %69 : vector<8x128xf32>
    %cst_38 = arith.constant 1.000000e+00 : f32
    %71 = vector.broadcast %cst_38 : f32 to vector<8x128xf32>
    %72 = arith.addf %70, %71 : vector<8x128xf32>
    %cst_39 = arith.constant 5.000000e-01 : f32
    %73 = vector.broadcast %cst_39 : f32 to vector<8x128xf32>
    %74 = arith.mulf %73, %72 : vector<8x128xf32>
    %75 = vector.extract_strided_slice %58 {offsets = [0, 256], sizes = [8, 128], strides = [1, 1]} : vector<8x512xf32> to vector<8x128xf32>
    %76 = math.tanh %75 : vector<8x128xf32>
    %77 = vector.extract_strided_slice %58 {offsets = [0, 384], sizes = [8, 128], strides = [1, 1]} : vector<8x512xf32> to vector<8x128xf32>
    %cst_40 = arith.constant 5.000000e-01 : f32
    %78 = vector.broadcast %cst_40 : f32 to vector<8x128xf32>
    %79 = arith.mulf %78, %77 : vector<8x128xf32>
    %80 = math.tanh %79 : vector<8x128xf32>
    %cst_41 = arith.constant 1.000000e+00 : f32
    %81 = vector.broadcast %cst_41 : f32 to vector<8x128xf32>
    %82 = arith.addf %80, %81 : vector<8x128xf32>
    %cst_42 = arith.constant 5.000000e-01 : f32
    %83 = vector.broadcast %cst_42 : f32 to vector<8x128xf32>
    %84 = arith.mulf %83, %82 : vector<8x128xf32>
    %85 = arith.mulf %74, %49 : vector<8x128xf32>
    %86 = arith.mulf %66, %76 : vector<8x128xf32>
    %87 = arith.addf %85, %86 : vector<8x128xf32>
    %88 = math.tanh %87 : vector<8x128xf32>
    %89 = arith.mulf %84, %88 : vector<8x128xf32>
    %c2_i32 = arith.constant 2 : i32
    %90 = arith.truncf %89 : vector<8x128xf32> to vector<8x128xbf16>
    %c0_43 = arith.constant 0 : index
    %c0_44 = arith.constant 0 : index
    %91 = vector.load %arg5[%c0_43, %c0_44] : memref<128x512xbf16, #tpu.memory_space<vmem>>, vector<128x512xbf16>
    %cst_45 = arith.constant dense<0.000000e+00> : vector<8x512xf32>
    %92 = tpu.matmul %90, %91, %cst_45 {dimension_numbers = #tpu.dot_dimension_numbers<[1], [0], [0], [1], [0, 0, 1, 1], [], []>} : vector<8x128xbf16>, vector<128x512xbf16>, vector<8x512xf32> -> vector<8x512xf32>
    %93 = arith.index_cast %c2_i32 : i32 to index
    %c0_46 = arith.constant 0 : index
    %c0_47 = arith.constant 0 : index
    %94 = vector.load %arg9[%93, %c0_46, %c0_47] : memref<8x8x512xf32, #tpu.memory_space<vmem>>, vector<1x8x512xf32>
    %95 = vector.shape_cast %94 : vector<1x8x512xf32> to vector<8x512xf32>
    %96 = arith.addf %92, %95 : vector<8x512xf32>
    %97 = vector.extract_strided_slice %96 {offsets = [0, 0], sizes = [8, 128], strides = [1, 1]} : vector<8x512xf32> to vector<8x128xf32>
    %cst_48 = arith.constant 5.000000e-01 : f32
    %98 = vector.broadcast %cst_48 : f32 to vector<8x128xf32>
    %99 = arith.mulf %98, %97 : vector<8x128xf32>
    %100 = math.tanh %99 : vector<8x128xf32>
    %cst_49 = arith.constant 1.000000e+00 : f32
    %101 = vector.broadcast %cst_49 : f32 to vector<8x128xf32>
    %102 = arith.addf %100, %101 : vector<8x128xf32>
    %cst_50 = arith.constant 5.000000e-01 : f32
    %103 = vector.broadcast %cst_50 : f32 to vector<8x128xf32>
    %104 = arith.mulf %103, %102 : vector<8x128xf32>
    %105 = vector.extract_strided_slice %96 {offsets = [0, 128], sizes = [8, 128], strides = [1, 1]} : vector<8x512xf32> to vector<8x128xf32>
    %cst_51 = arith.constant 5.000000e-01 : f32
    %106 = vector.broadcast %cst_51 : f32 to vector<8x128xf32>
    %107 = arith.mulf %106, %105 : vector<8x128xf32>
    %108 = math.tanh %107 : vector<8x128xf32>
    %cst_52 = arith.constant 1.000000e+00 : f32
    %109 = vector.broadcast %cst_52 : f32 to vector<8x128xf32>
    %110 = arith.addf %108, %109 : vector<8x128xf32>
    %cst_53 = arith.constant 5.000000e-01 : f32
    %111 = vector.broadcast %cst_53 : f32 to vector<8x128xf32>
    %112 = arith.mulf %111, %110 : vector<8x128xf32>
    %113 = vector.extract_strided_slice %96 {offsets = [0, 256], sizes = [8, 128], strides = [1, 1]} : vector<8x512xf32> to vector<8x128xf32>
    %114 = math.tanh %113 : vector<8x128xf32>
    %115 = vector.extract_strided_slice %96 {offsets = [0, 384], sizes = [8, 128], strides = [1, 1]} : vector<8x512xf32> to vector<8x128xf32>
    %cst_54 = arith.constant 5.000000e-01 : f32
    %116 = vector.broadcast %cst_54 : f32 to vector<8x128xf32>
    %117 = arith.mulf %116, %115 : vector<8x128xf32>
    %118 = math.tanh %117 : vector<8x128xf32>
    %cst_55 = arith.constant 1.000000e+00 : f32
    %119 = vector.broadcast %cst_55 : f32 to vector<8x128xf32>
    %120 = arith.addf %118, %119 : vector<8x128xf32>
    %cst_56 = arith.constant 5.000000e-01 : f32
    %121 = vector.broadcast %cst_56 : f32 to vector<8x128xf32>
    %122 = arith.mulf %121, %120 : vector<8x128xf32>
    %123 = arith.mulf %112, %87 : vector<8x128xf32>
    %124 = arith.mulf %104, %114 : vector<8x128xf32>
    %125 = arith.addf %123, %124 : vector<8x128xf32>
    %126 = math.tanh %125 : vector<8x128xf32>
    %127 = arith.mulf %122, %126 : vector<8x128xf32>
    %c3_i32 = arith.constant 3 : i32
    %128 = arith.truncf %127 : vector<8x128xf32> to vector<8x128xbf16>
    %c0_57 = arith.constant 0 : index
    %c0_58 = arith.constant 0 : index
    %129 = vector.load %arg5[%c0_57, %c0_58] : memref<128x512xbf16, #tpu.memory_space<vmem>>, vector<128x512xbf16>
    %cst_59 = arith.constant dense<0.000000e+00> : vector<8x512xf32>
    %130 = tpu.matmul %128, %129, %cst_59 {dimension_numbers = #tpu.dot_dimension_numbers<[1], [0], [0], [1], [0, 0, 1, 1], [], []>} : vector<8x128xbf16>, vector<128x512xbf16>, vector<8x512xf32> -> vector<8x512xf32>
    %131 = arith.index_cast %c3_i32 : i32 to index
    %c0_60 = arith.constant 0 : index
    %c0_61 = arith.constant 0 : index
    %132 = vector.load %arg9[%131, %c0_60, %c0_61] : memref<8x8x512xf32, #tpu.memory_space<vmem>>, vector<1x8x512xf32>
    %133 = vector.shape_cast %132 : vector<1x8x512xf32> to vector<8x512xf32>
    %134 = arith.addf %130, %133 : vector<8x512xf32>
    %135 = vector.extract_strided_slice %134 {offsets = [0, 0], sizes = [8, 128], strides = [1, 1]} : vector<8x512xf32> to vector<8x128xf32>
    %cst_62 = arith.constant 5.000000e-01 : f32
    %136 = vector.broadcast %cst_62 : f32 to vector<8x128xf32>
    %137 = arith.mulf %136, %135 : vector<8x128xf32>
    %138 = math.tanh %137 : vector<8x128xf32>
    %cst_63 = arith.constant 1.000000e+00 : f32
    %139 = vector.broadcast %cst_63 : f32 to vector<8x128xf32>
    %140 = arith.addf %138, %139 : vector<8x128xf32>
    %cst_64 = arith.constant 5.000000e-01 : f32
    %141 = vector.broadcast %cst_64 : f32 to vector<8x128xf32>
    %142 = arith.mulf %141, %140 : vector<8x128xf32>
    %143 = vector.extract_strided_slice %134 {offsets = [0, 128], sizes = [8, 128], strides = [1, 1]} : vector<8x512xf32> to vector<8x128xf32>
    %cst_65 = arith.constant 5.000000e-01 : f32
    %144 = vector.broadcast %cst_65 : f32 to vector<8x128xf32>
    %145 = arith.mulf %144, %143 : vector<8x128xf32>
    %146 = math.tanh %145 : vector<8x128xf32>
    %cst_66 = arith.constant 1.000000e+00 : f32
    %147 = vector.broadcast %cst_66 : f32 to vector<8x128xf32>
    %148 = arith.addf %146, %147 : vector<8x128xf32>
    %cst_67 = arith.constant 5.000000e-01 : f32
    %149 = vector.broadcast %cst_67 : f32 to vector<8x128xf32>
    %150 = arith.mulf %149, %148 : vector<8x128xf32>
    %151 = vector.extract_strided_slice %134 {offsets = [0, 256], sizes = [8, 128], strides = [1, 1]} : vector<8x512xf32> to vector<8x128xf32>
    %152 = math.tanh %151 : vector<8x128xf32>
    %153 = vector.extract_strided_slice %134 {offsets = [0, 384], sizes = [8, 128], strides = [1, 1]} : vector<8x512xf32> to vector<8x128xf32>
    %cst_68 = arith.constant 5.000000e-01 : f32
    %154 = vector.broadcast %cst_68 : f32 to vector<8x128xf32>
    %155 = arith.mulf %154, %153 : vector<8x128xf32>
    %156 = math.tanh %155 : vector<8x128xf32>
    %cst_69 = arith.constant 1.000000e+00 : f32
    %157 = vector.broadcast %cst_69 : f32 to vector<8x128xf32>
    %158 = arith.addf %156, %157 : vector<8x128xf32>
    %cst_70 = arith.constant 5.000000e-01 : f32
    %159 = vector.broadcast %cst_70 : f32 to vector<8x128xf32>
    %160 = arith.mulf %159, %158 : vector<8x128xf32>
    %161 = arith.mulf %150, %125 : vector<8x128xf32>
    %162 = arith.mulf %142, %152 : vector<8x128xf32>
    %163 = arith.addf %161, %162 : vector<8x128xf32>
    %164 = math.tanh %163 : vector<8x128xf32>
    %165 = arith.mulf %160, %164 : vector<8x128xf32>
    %c4_i32 = arith.constant 4 : i32
    %166 = arith.truncf %165 : vector<8x128xf32> to vector<8x128xbf16>
    %c0_71 = arith.constant 0 : index
    %c0_72 = arith.constant 0 : index
    %167 = vector.load %arg5[%c0_71, %c0_72] : memref<128x512xbf16, #tpu.memory_space<vmem>>, vector<128x512xbf16>
    %cst_73 = arith.constant dense<0.000000e+00> : vector<8x512xf32>
    %168 = tpu.matmul %166, %167, %cst_73 {dimension_numbers = #tpu.dot_dimension_numbers<[1], [0], [0], [1], [0, 0, 1, 1], [], []>} : vector<8x128xbf16>, vector<128x512xbf16>, vector<8x512xf32> -> vector<8x512xf32>
    %169 = arith.index_cast %c4_i32 : i32 to index
    %c0_74 = arith.constant 0 : index
    %c0_75 = arith.constant 0 : index
    %170 = vector.load %arg9[%169, %c0_74, %c0_75] : memref<8x8x512xf32, #tpu.memory_space<vmem>>, vector<1x8x512xf32>
    %171 = vector.shape_cast %170 : vector<1x8x512xf32> to vector<8x512xf32>
    %172 = arith.addf %168, %171 : vector<8x512xf32>
    %173 = vector.extract_strided_slice %172 {offsets = [0, 0], sizes = [8, 128], strides = [1, 1]} : vector<8x512xf32> to vector<8x128xf32>
    %cst_76 = arith.constant 5.000000e-01 : f32
    %174 = vector.broadcast %cst_76 : f32 to vector<8x128xf32>
    %175 = arith.mulf %174, %173 : vector<8x128xf32>
    %176 = math.tanh %175 : vector<8x128xf32>
    %cst_77 = arith.constant 1.000000e+00 : f32
    %177 = vector.broadcast %cst_77 : f32 to vector<8x128xf32>
    %178 = arith.addf %176, %177 : vector<8x128xf32>
    %cst_78 = arith.constant 5.000000e-01 : f32
    %179 = vector.broadcast %cst_78 : f32 to vector<8x128xf32>
    %180 = arith.mulf %179, %178 : vector<8x128xf32>
    %181 = vector.extract_strided_slice %172 {offsets = [0, 128], sizes = [8, 128], strides = [1, 1]} : vector<8x512xf32> to vector<8x128xf32>
    %cst_79 = arith.constant 5.000000e-01 : f32
    %182 = vector.broadcast %cst_79 : f32 to vector<8x128xf32>
    %183 = arith.mulf %182, %181 : vector<8x128xf32>
    %184 = math.tanh %183 : vector<8x128xf32>
    %cst_80 = arith.constant 1.000000e+00 : f32
    %185 = vector.broadcast %cst_80 : f32 to vector<8x128xf32>
    %186 = arith.addf %184, %185 : vector<8x128xf32>
    %cst_81 = arith.constant 5.000000e-01 : f32
    %187 = vector.broadcast %cst_81 : f32 to vector<8x128xf32>
    %188 = arith.mulf %187, %186 : vector<8x128xf32>
    %189 = vector.extract_strided_slice %172 {offsets = [0, 256], sizes = [8, 128], strides = [1, 1]} : vector<8x512xf32> to vector<8x128xf32>
    %190 = math.tanh %189 : vector<8x128xf32>
    %191 = vector.extract_strided_slice %172 {offsets = [0, 384], sizes = [8, 128], strides = [1, 1]} : vector<8x512xf32> to vector<8x128xf32>
    %cst_82 = arith.constant 5.000000e-01 : f32
    %192 = vector.broadcast %cst_82 : f32 to vector<8x128xf32>
    %193 = arith.mulf %192, %191 : vector<8x128xf32>
    %194 = math.tanh %193 : vector<8x128xf32>
    %cst_83 = arith.constant 1.000000e+00 : f32
    %195 = vector.broadcast %cst_83 : f32 to vector<8x128xf32>
    %196 = arith.addf %194, %195 : vector<8x128xf32>
    %cst_84 = arith.constant 5.000000e-01 : f32
    %197 = vector.broadcast %cst_84 : f32 to vector<8x128xf32>
    %198 = arith.mulf %197, %196 : vector<8x128xf32>
    %199 = arith.mulf %188, %163 : vector<8x128xf32>
    %200 = arith.mulf %180, %190 : vector<8x128xf32>
    %201 = arith.addf %199, %200 : vector<8x128xf32>
    %202 = math.tanh %201 : vector<8x128xf32>
    %203 = arith.mulf %198, %202 : vector<8x128xf32>
    %c5_i32 = arith.constant 5 : i32
    %204 = arith.truncf %203 : vector<8x128xf32> to vector<8x128xbf16>
    %c0_85 = arith.constant 0 : index
    %c0_86 = arith.constant 0 : index
    %205 = vector.load %arg5[%c0_85, %c0_86] : memref<128x512xbf16, #tpu.memory_space<vmem>>, vector<128x512xbf16>
    %cst_87 = arith.constant dense<0.000000e+00> : vector<8x512xf32>
    %206 = tpu.matmul %204, %205, %cst_87 {dimension_numbers = #tpu.dot_dimension_numbers<[1], [0], [0], [1], [0, 0, 1, 1], [], []>} : vector<8x128xbf16>, vector<128x512xbf16>, vector<8x512xf32> -> vector<8x512xf32>
    %207 = arith.index_cast %c5_i32 : i32 to index
    %c0_88 = arith.constant 0 : index
    %c0_89 = arith.constant 0 : index
    %208 = vector.load %arg9[%207, %c0_88, %c0_89] : memref<8x8x512xf32, #tpu.memory_space<vmem>>, vector<1x8x512xf32>
    %209 = vector.shape_cast %208 : vector<1x8x512xf32> to vector<8x512xf32>
    %210 = arith.addf %206, %209 : vector<8x512xf32>
    %211 = vector.extract_strided_slice %210 {offsets = [0, 0], sizes = [8, 128], strides = [1, 1]} : vector<8x512xf32> to vector<8x128xf32>
    %cst_90 = arith.constant 5.000000e-01 : f32
    %212 = vector.broadcast %cst_90 : f32 to vector<8x128xf32>
    %213 = arith.mulf %212, %211 : vector<8x128xf32>
    %214 = math.tanh %213 : vector<8x128xf32>
    %cst_91 = arith.constant 1.000000e+00 : f32
    %215 = vector.broadcast %cst_91 : f32 to vector<8x128xf32>
    %216 = arith.addf %214, %215 : vector<8x128xf32>
    %cst_92 = arith.constant 5.000000e-01 : f32
    %217 = vector.broadcast %cst_92 : f32 to vector<8x128xf32>
    %218 = arith.mulf %217, %216 : vector<8x128xf32>
    %219 = vector.extract_strided_slice %210 {offsets = [0, 128], sizes = [8, 128], strides = [1, 1]} : vector<8x512xf32> to vector<8x128xf32>
    %cst_93 = arith.constant 5.000000e-01 : f32
    %220 = vector.broadcast %cst_93 : f32 to vector<8x128xf32>
    %221 = arith.mulf %220, %219 : vector<8x128xf32>
    %222 = math.tanh %221 : vector<8x128xf32>
    %cst_94 = arith.constant 1.000000e+00 : f32
    %223 = vector.broadcast %cst_94 : f32 to vector<8x128xf32>
    %224 = arith.addf %222, %223 : vector<8x128xf32>
    %cst_95 = arith.constant 5.000000e-01 : f32
    %225 = vector.broadcast %cst_95 : f32 to vector<8x128xf32>
    %226 = arith.mulf %225, %224 : vector<8x128xf32>
    %227 = vector.extract_strided_slice %210 {offsets = [0, 256], sizes = [8, 128], strides = [1, 1]} : vector<8x512xf32> to vector<8x128xf32>
    %228 = math.tanh %227 : vector<8x128xf32>
    %229 = vector.extract_strided_slice %210 {offsets = [0, 384], sizes = [8, 128], strides = [1, 1]} : vector<8x512xf32> to vector<8x128xf32>
    %cst_96 = arith.constant 5.000000e-01 : f32
    %230 = vector.broadcast %cst_96 : f32 to vector<8x128xf32>
    %231 = arith.mulf %230, %229 : vector<8x128xf32>
    %232 = math.tanh %231 : vector<8x128xf32>
    %cst_97 = arith.constant 1.000000e+00 : f32
    %233 = vector.broadcast %cst_97 : f32 to vector<8x128xf32>
    %234 = arith.addf %232, %233 : vector<8x128xf32>
    %cst_98 = arith.constant 5.000000e-01 : f32
    %235 = vector.broadcast %cst_98 : f32 to vector<8x128xf32>
    %236 = arith.mulf %235, %234 : vector<8x128xf32>
    %237 = arith.mulf %226, %201 : vector<8x128xf32>
    %238 = arith.mulf %218, %228 : vector<8x128xf32>
    %239 = arith.addf %237, %238 : vector<8x128xf32>
    %240 = math.tanh %239 : vector<8x128xf32>
    %241 = arith.mulf %236, %240 : vector<8x128xf32>
    %c6_i32 = arith.constant 6 : i32
    %242 = arith.truncf %241 : vector<8x128xf32> to vector<8x128xbf16>
    %c0_99 = arith.constant 0 : index
    %c0_100 = arith.constant 0 : index
    %243 = vector.load %arg5[%c0_99, %c0_100] : memref<128x512xbf16, #tpu.memory_space<vmem>>, vector<128x512xbf16>
    %cst_101 = arith.constant dense<0.000000e+00> : vector<8x512xf32>
    %244 = tpu.matmul %242, %243, %cst_101 {dimension_numbers = #tpu.dot_dimension_numbers<[1], [0], [0], [1], [0, 0, 1, 1], [], []>} : vector<8x128xbf16>, vector<128x512xbf16>, vector<8x512xf32> -> vector<8x512xf32>
    %245 = arith.index_cast %c6_i32 : i32 to index
    %c0_102 = arith.constant 0 : index
    %c0_103 = arith.constant 0 : index
    %246 = vector.load %arg9[%245, %c0_102, %c0_103] : memref<8x8x512xf32, #tpu.memory_space<vmem>>, vector<1x8x512xf32>
    %247 = vector.shape_cast %246 : vector<1x8x512xf32> to vector<8x512xf32>
    %248 = arith.addf %244, %247 : vector<8x512xf32>
    %249 = vector.extract_strided_slice %248 {offsets = [0, 0], sizes = [8, 128], strides = [1, 1]} : vector<8x512xf32> to vector<8x128xf32>
    %cst_104 = arith.constant 5.000000e-01 : f32
    %250 = vector.broadcast %cst_104 : f32 to vector<8x128xf32>
    %251 = arith.mulf %250, %249 : vector<8x128xf32>
    %252 = math.tanh %251 : vector<8x128xf32>
    %cst_105 = arith.constant 1.000000e+00 : f32
    %253 = vector.broadcast %cst_105 : f32 to vector<8x128xf32>
    %254 = arith.addf %252, %253 : vector<8x128xf32>
    %cst_106 = arith.constant 5.000000e-01 : f32
    %255 = vector.broadcast %cst_106 : f32 to vector<8x128xf32>
    %256 = arith.mulf %255, %254 : vector<8x128xf32>
    %257 = vector.extract_strided_slice %248 {offsets = [0, 128], sizes = [8, 128], strides = [1, 1]} : vector<8x512xf32> to vector<8x128xf32>
    %cst_107 = arith.constant 5.000000e-01 : f32
    %258 = vector.broadcast %cst_107 : f32 to vector<8x128xf32>
    %259 = arith.mulf %258, %257 : vector<8x128xf32>
    %260 = math.tanh %259 : vector<8x128xf32>
    %cst_108 = arith.constant 1.000000e+00 : f32
    %261 = vector.broadcast %cst_108 : f32 to vector<8x128xf32>
    %262 = arith.addf %260, %261 : vector<8x128xf32>
    %cst_109 = arith.constant 5.000000e-01 : f32
    %263 = vector.broadcast %cst_109 : f32 to vector<8x128xf32>
    %264 = arith.mulf %263, %262 : vector<8x128xf32>
    %265 = vector.extract_strided_slice %248 {offsets = [0, 256], sizes = [8, 128], strides = [1, 1]} : vector<8x512xf32> to vector<8x128xf32>
    %266 = math.tanh %265 : vector<8x128xf32>
    %267 = vector.extract_strided_slice %248 {offsets = [0, 384], sizes = [8, 128], strides = [1, 1]} : vector<8x512xf32> to vector<8x128xf32>
    %cst_110 = arith.constant 5.000000e-01 : f32
    %268 = vector.broadcast %cst_110 : f32 to vector<8x128xf32>
    %269 = arith.mulf %268, %267 : vector<8x128xf32>
    %270 = math.tanh %269 : vector<8x128xf32>
    %cst_111 = arith.constant 1.000000e+00 : f32
    %271 = vector.broadcast %cst_111 : f32 to vector<8x128xf32>
    %272 = arith.addf %270, %271 : vector<8x128xf32>
    %cst_112 = arith.constant 5.000000e-01 : f32
    %273 = vector.broadcast %cst_112 : f32 to vector<8x128xf32>
    %274 = arith.mulf %273, %272 : vector<8x128xf32>
    %275 = arith.mulf %264, %239 : vector<8x128xf32>
    %276 = arith.mulf %256, %266 : vector<8x128xf32>
    %277 = arith.addf %275, %276 : vector<8x128xf32>
    %278 = math.tanh %277 : vector<8x128xf32>
    %279 = arith.mulf %274, %278 : vector<8x128xf32>
    %c7_i32 = arith.constant 7 : i32
    %280 = arith.truncf %279 : vector<8x128xf32> to vector<8x128xbf16>
    %c0_113 = arith.constant 0 : index
    %c0_114 = arith.constant 0 : index
    %281 = vector.load %arg5[%c0_113, %c0_114] : memref<128x512xbf16, #tpu.memory_space<vmem>>, vector<128x512xbf16>
    %cst_115 = arith.constant dense<0.000000e+00> : vector<8x512xf32>
    %282 = tpu.matmul %280, %281, %cst_115 {dimension_numbers = #tpu.dot_dimension_numbers<[1], [0], [0], [1], [0, 0, 1, 1], [], []>} : vector<8x128xbf16>, vector<128x512xbf16>, vector<8x512xf32> -> vector<8x512xf32>
    %283 = arith.index_cast %c7_i32 : i32 to index
    %c0_116 = arith.constant 0 : index
    %c0_117 = arith.constant 0 : index
    %284 = vector.load %arg9[%283, %c0_116, %c0_117] : memref<8x8x512xf32, #tpu.memory_space<vmem>>, vector<1x8x512xf32>
    %285 = vector.shape_cast %284 : vector<1x8x512xf32> to vector<8x512xf32>
    %286 = arith.addf %282, %285 : vector<8x512xf32>
    %287 = vector.extract_strided_slice %286 {offsets = [0, 0], sizes = [8, 128], strides = [1, 1]} : vector<8x512xf32> to vector<8x128xf32>
    %cst_118 = arith.constant 5.000000e-01 : f32
    %288 = vector.broadcast %cst_118 : f32 to vector<8x128xf32>
    %289 = arith.mulf %288, %287 : vector<8x128xf32>
    %290 = math.tanh %289 : vector<8x128xf32>
    %cst_119 = arith.constant 1.000000e+00 : f32
    %291 = vector.broadcast %cst_119 : f32 to vector<8x128xf32>
    %292 = arith.addf %290, %291 : vector<8x128xf32>
    %cst_120 = arith.constant 5.000000e-01 : f32
    %293 = vector.broadcast %cst_120 : f32 to vector<8x128xf32>
    %294 = arith.mulf %293, %292 : vector<8x128xf32>
    %295 = vector.extract_strided_slice %286 {offsets = [0, 128], sizes = [8, 128], strides = [1, 1]} : vector<8x512xf32> to vector<8x128xf32>
    %cst_121 = arith.constant 5.000000e-01 : f32
    %296 = vector.broadcast %cst_121 : f32 to vector<8x128xf32>
    %297 = arith.mulf %296, %295 : vector<8x128xf32>
    %298 = math.tanh %297 : vector<8x128xf32>
    %cst_122 = arith.constant 1.000000e+00 : f32
    %299 = vector.broadcast %cst_122 : f32 to vector<8x128xf32>
    %300 = arith.addf %298, %299 : vector<8x128xf32>
    %cst_123 = arith.constant 5.000000e-01 : f32
    %301 = vector.broadcast %cst_123 : f32 to vector<8x128xf32>
    %302 = arith.mulf %301, %300 : vector<8x128xf32>
    %303 = vector.extract_strided_slice %286 {offsets = [0, 256], sizes = [8, 128], strides = [1, 1]} : vector<8x512xf32> to vector<8x128xf32>
    %304 = math.tanh %303 : vector<8x128xf32>
    %305 = vector.extract_strided_slice %286 {offsets = [0, 384], sizes = [8, 128], strides = [1, 1]} : vector<8x512xf32> to vector<8x128xf32>
    %cst_124 = arith.constant 5.000000e-01 : f32
    %306 = vector.broadcast %cst_124 : f32 to vector<8x128xf32>
    %307 = arith.mulf %306, %305 : vector<8x128xf32>
    %308 = math.tanh %307 : vector<8x128xf32>
    %cst_125 = arith.constant 1.000000e+00 : f32
    %309 = vector.broadcast %cst_125 : f32 to vector<8x128xf32>
    %310 = arith.addf %308, %309 : vector<8x128xf32>
    %cst_126 = arith.constant 5.000000e-01 : f32
    %311 = vector.broadcast %cst_126 : f32 to vector<8x128xf32>
    %312 = arith.mulf %311, %310 : vector<8x128xf32>
    %313 = arith.mulf %302, %277 : vector<8x128xf32>
    %314 = arith.mulf %294, %304 : vector<8x128xf32>
    %315 = arith.addf %313, %314 : vector<8x128xf32>
    %316 = math.tanh %315 : vector<8x128xf32>
    %317 = arith.mulf %312, %316 : vector<8x128xf32>
    %c8_i32 = arith.constant 8 : i32
    %c0_127 = arith.constant 0 : index
    %c0_128 = arith.constant 0 : index
    %318 = vector.load %arg10[%c0_127, %c0_128] : memref<8x128xf32, #tpu.memory_space<vmem>>, vector<8x128xf32>
    tpu.vector_store %arg10[%c0_127, %c0_128], %317 {strides = array<i32>} : memref<8x128xf32, #tpu.memory_space<vmem>>, vector<8x128xf32>,
    %c0_129 = arith.constant 0 : index
    %c0_130 = arith.constant 0 : index
    %319 = vector.load %arg11[%c0_129, %c0_130] : memref<8x128xf32, #tpu.memory_space<vmem>>, vector<8x128xf32>
    tpu.vector_store %arg11[%c0_129, %c0_130], %315 {strides = array<i32>} : memref<8x128xf32, #tpu.memory_space<vmem>>, vector<8x128xf32>,
    %c0_i32_131 = arith.constant 0 : i32
    %320 = arith.cmpi eq, %arg1, %c0_i32_131 : i32
    %321 = arith.extui %320 : i1 to i32
    %c0_i32_132 = arith.constant 0 : i32
    %322 = arith.cmpi ne, %321, %c0_i32_132 : i32
    scf.if %322 {
      %c0_133 = arith.constant 0 : index
      %c0_134 = arith.constant 0 : index
      %323 = vector.load %arg6[%c0_133, %c0_134] : memref<128x128xf32, #tpu.memory_space<vmem>>, vector<128x128xf32>
      %cst_135 = arith.constant dense<0.000000e+00> : vector<8x128xf32>
      %324 = tpu.matmul %317, %323, %cst_135 {dimension_numbers = #tpu.dot_dimension_numbers<[1], [0], [0], [1], [0, 0, 1, 1], [], []>} : vector<8x128xf32>, vector<128x128xf32>, vector<8x128xf32> -> vector<8x128xf32>
      %c0_136 = arith.constant 0 : index
      %c0_137 = arith.constant 0 : index
      %325 = vector.load %arg7[%c0_136, %c0_137] : memref<1x128xf32, #tpu.memory_space<vmem>>, vector<1x128xf32>
      %326 = vector.broadcast %325 : vector<1x128xf32> to vector<8x128xf32>
      %327 = arith.addf %324, %326 : vector<8x128xf32>
      %c0_138 = arith.constant 0 : index
      %c0_139 = arith.constant 0 : index
      %328 = vector.load %arg8[%c0_138, %c0_139] : memref<8x128xf32, #tpu.memory_space<vmem>>, vector<8x128xf32>
      tpu.vector_store %arg8[%c0_138, %c0_139], %327 {strides = array<i32>} : memref<8x128xf32, #tpu.memory_space<vmem>>, vector<8x128xf32>,
    } else {
    }
    return
  }
  func.func @transform_0(%arg0: i32, %arg1: i32) -> (i32, i32, i32) {
    %c0_i32 = arith.constant 0 : i32
    %c0_i32_0 = arith.constant 0 : i32
    return %arg1, %arg0, %c0_i32 : i32, i32, i32
  }
  func.func @transform_1(%arg0: i32, %arg1: i32) -> (i32, i32) {
    %c0_i32 = arith.constant 0 : i32
    %c0_i32_0 = arith.constant 0 : i32
    %c0_i32_1 = arith.constant 0 : i32
    return %c0_i32, %c0_i32_0 : i32, i32
  }
  func.func @transform_2(%arg0: i32, %arg1: i32) -> (i32, i32) {
    %c0_i32 = arith.constant 0 : i32
    %c0_i32_0 = arith.constant 0 : i32
    %c0_i32_1 = arith.constant 0 : i32
    return %c0_i32, %c0_i32_0 : i32, i32
  }
  func.func @transform_3(%arg0: i32, %arg1: i32) -> (i32, i32) {
    %c0_i32 = arith.constant 0 : i32
    %c0_i32_0 = arith.constant 0 : i32
    %c0_i32_1 = arith.constant 0 : i32
    return %c0_i32, %c0_i32_0 : i32, i32
  }
  func.func @transform_4(%arg0: i32, %arg1: i32) -> (i32, i32) {
    %c0_i32 = arith.constant 0 : i32
    %c0_i32_0 = arith.constant 0 : i32
    %c0_i32_1 = arith.constant 0 : i32
    return %c0_i32, %c0_i32_0 : i32, i32
  }
  func.func @transform_5(%arg0: i32, %arg1: i32) -> (i32, i32) {
    %c0_i32 = arith.constant 0 : i32
    %c0_i32_0 = arith.constant 0 : i32
    %c0_i32_1 = arith.constant 0 : i32
    return %c0_i32, %c0_i32_0 : i32, i32
  }
  func.func @transform_6(%arg0: i32, %arg1: i32) -> (i32, i32) {
    %c0_i32 = arith.constant 0 : i32
    %c0_i32_0 = arith.constant 0 : i32
    return %arg0, %c0_i32 : i32, i32
  }
}

</mosaic_0001>

<llo_original>
// kernel: lstm_model_forward.1
$region0: #{lstm_model_forward.1}
  #allocation0 [shape = 'u32[]', space=smem, size = 0x4, offset = 0x4, fixed_abs, tag = 'smem constant byte address 0x4 - core index']
  #allocation1 [shape = 'u32[144,128]{1,0:T(1,128)}', space=vmem, size = 0x12000, scoped, tag = 'internal scratch']
  #allocation2 [shape = 'f32[8,8,512]{2,1,0:T(8,128)}', space=vmem, size = 0x20000, scoped, tag = 'scratch operand']
  #allocation3 [shape = 'f32[8,128]{1,0:T(8,128)}', space=vmem, size = 0x1000, scoped, tag = 'scratch operand']
  #allocation4 [shape = 'f32[8,128]{1,0:T(8,128)}', space=vmem, size = 0x1000, scoped, tag = 'scratch operand']
  %s0 = inlined_call_operand.vmem [shape: bf16[8,8,16], index: 0, kind: input, shape index: {}]
  %s1 = inlined_call_operand.vmem [shape: bf16[16,512], index: 1, kind: input, shape index: {}]
  %s2 = inlined_call_operand.vmem [shape: f32[1,512], index: 2, kind: input, shape index: {}]
  %s3 = inlined_call_operand.vmem [shape: bf16[128,512], index: 3, kind: input, shape index: {}]
  %s4 = inlined_call_operand.vmem [shape: f32[128,128], index: 4, kind: input, shape index: {}]
  %s5 = inlined_call_operand.vmem [shape: f32[1,128], index: 5, kind: input, shape index: {}]
  %s6 = inlined_call_operand.vmem [shape: f32[8,128], index: 6, kind: output, shape index: {}]
  %s7 = sld [smem:[#allocation0]]
  $region42: #{lstm_model_forward.1} parent=0
    _
  %s9 = ssub.s32 1, %s7
  %s10 = scalar_select 0, %s9, %s7
  // Predicated region
  $region2: #{lstm_model_forward.1} parent=0 // pred_check
    _
  $region3: #{lstm_model_forward.1} parent=0 // pred_check_branch
    %12 = sbr.rel (0) target = $region5
  $region4: #{lstm_model_forward.1} parent=0 // pred_region
    _
  $region5: #{lstm_model_forward.1} parent=0 // pred_fallthru
    _
  // Predicated region
  $region6: #{lstm_model_forward.1} parent=0 // pred_check
    _
  $region7: #{lstm_model_forward.1} parent=0 // pred_check_branch
    %14 = sbr.rel (0) target = $region9
  $region8: #{lstm_model_forward.1} parent=0 // pred_region
    _
  $region9: #{lstm_model_forward.1} parent=0 // pred_fallthru
    _
  // Predicated region
  $region10: #{lstm_model_forward.1} parent=0 // pred_check
    _
  $region11: #{lstm_model_forward.1} parent=0 // pred_check_branch
    %16 = sbr.rel (0) target = $region13
  $region12: #{lstm_model_forward.1} parent=0 // pred_region
    _
  $region13: #{lstm_model_forward.1} parent=0 // pred_fallthru
    _
  // Predicated region
  $region14: #{lstm_model_forward.1} parent=0 // pred_check
    _
  $region15: #{lstm_model_forward.1} parent=0 // pred_check_branch
    %18 = sbr.rel (0) target = $region17
  $region16: #{lstm_model_forward.1} parent=0 // pred_region
    _
  $region17: #{lstm_model_forward.1} parent=0 // pred_fallthru
    _
  // Predicated region
  $region18: #{lstm_model_forward.1} parent=0 // pred_check
    _
  $region19: #{lstm_model_forward.1} parent=0 // pred_check_branch
    %20 = sbr.rel (0) target = $region21
  $region20: #{lstm_model_forward.1} parent=0 // pred_region
    _
  $region21: #{lstm_model_forward.1} parent=0 // pred_fallthru
    _
  // Predicated region
  $region22: #{lstm_model_forward.1} parent=0 // pred_check
    _
  $region23: #{lstm_model_forward.1} parent=0 // pred_check_branch
    %22 = sbr.rel (0) target = $region25
  $region24: #{lstm_model_forward.1} parent=0 // pred_region
    _
  $region25: #{lstm_model_forward.1} parent=0 // pred_fallthru
    _
  %p24 = scmp.eq.s32.totalorder 0, 0
  // Predicated region
  $region26: #{lstm_model_forward.1} parent=0 // pred_check
    %p25 = pneg %p24
  $region27: #{lstm_model_forward.1} parent=0 // pred_check_branch
    %27 = sbr.rel (%p25) target = $region29
  $region28: #{lstm_model_forward.1} parent=0 // pred_region
    %28 = vst [vmem:[#allocation3] sm:$0xff] 0.0
    %29 = vst [vmem:[#allocation4] sm:$0xff] 0.0
  $region29: #{lstm_model_forward.1} parent=0 // pred_fallthru
    _
  %v30 = vld [vmem:[%s0] sm:$0xf]
  %v31 = vld [vmem:[%s0 + $0x4] sm:$0xf]
  %v32 = vld [vmem:[%s0 + $0x8] sm:$0xf]
  %v33 = vld [vmem:[%s0 + $0xc] sm:$0xf]
  %v34 = vld [vmem:[%s0 + $0x10] sm:$0xf]
  %v35 = vld [vmem:[%s0 + $0x14] sm:$0xf]
  %v36 = vld [vmem:[%s0 + $0x18] sm:$0xf]
  %v37 = vld [vmem:[%s0 + $0x1c] sm:$0xf]
  %v38 = vld [vmem:[%s1] sm:$0xff]
  %v39 = vld [vmem:[%s1 + $0x8] sm:$0xff]
  %v40 = vld [vmem:[%s1 + $0x10] sm:$0xff]
  %v41 = vld [vmem:[%s1 + $0x18] sm:$0xff]
  %v42 = vld [vmem:[%s2] sm:$0xf]
  %v44 = vlaneseq
  %v45 = vshrl.u32 %v44, 7
  %v46 = vsub.s32 0, %v45
  %v47 = vrot.slane %v42, %v46
  %v48 = vlaneseq
  %v49 = vshrl.u32 %v48, 7
  %v50 = vsub.s32 1, %v49
  %v51 = vrot.slane %v42, %v50
  %v52 = vlaneseq
  %v53 = vshrl.u32 %v52, 7
  %v54 = vsub.s32 2, %v53
  %v55 = vrot.slane %v42, %v54
  %v56 = vlaneseq
  %v57 = vshrl.u32 %v56, 7
  %v58 = vsub.s32 3, %v57
  %v59 = vrot.slane %v42, %v58
  %v72 = vunpack.c.l.b16 %v30
  %v73 = vunpack.c.l.b16 %v31
  %v74 = vunpack.c.l.b16 %v32
  %v75 = vunpack.c.l.b16 %v33
  %v76 = vunpack.c.l.b16 %v34
  %v77 = vunpack.c.l.b16 %v35
  %v78 = vunpack.c.l.b16 %v36
  %v79 = vunpack.c.l.b16 %v37
  %v80 = vpack.c.b16 %v73, %v72
  %v81 = vpack.c.b16 %v75, %v74
  %v82 = vpack.c.b16 %v77, %v76
  %v83 = vpack.c.b16 %v79, %v78
  %v88 = vunpack.c.l.b16 %v38
  %v89 = vunpack.c.h.b16 %v38
  %v90 = vunpack.c.l.b16 %v39
  %v91 = vunpack.c.h.b16 %v39
  %v92 = vunpack.c.l.b16 %v40
  %v93 = vunpack.c.h.b16 %v40
  %v94 = vunpack.c.l.b16 %v41
  %v95 = vunpack.c.h.b16 %v41
  %v96 = vpack.c.b16 %v92, %v88
  %v97 = vpack.c.b16 %v93, %v89
  %v98 = vpack.c.b16 %v94, %v90
  %v99 = vpack.c.b16 %v95, %v91
  %vm104 = vcmask 130048
  %v106 = vsel %vm104, %v80, 0
  %v109 = vsel %vm104, %v81, 0
  %v112 = vsel %vm104, %v82, 0
  %v115 = vsel %vm104, %v83, 0
  %117 = vmatprep.subr.bf16.mxu0 0
  %118 = vmatpush1.bf16.msra.mxu0 0
  %119 = vmatprep.subr.bf16.mxu0 0
  %120 = vmatpush1.bf16.msra.mxu0 0
  %121 = vmatprep.subr.bf16.mxu0 0
  %122 = vmatpush1.bf16.msra.mxu0 0
  %123 = vmatprep.subr.bf16.mxu0 0
  %124 = vmatpush1.bf16.msra.mxu0 0
  %125 = vmatprep.subr.bf16.mxu0 0
  %126 = vmatpush1.bf16.msra.mxu0 0
  %127 = vmatprep.subr.bf16.mxu0 0
  %128 = vmatpush1.bf16.msra.mxu0 0
  %129 = vmatprep.subr.bf16.mxu0 0
  %130 = vmatpush1.bf16.msra.mxu0 0
  %131 = vmatprep.subr.bf16.mxu0 %v97
  %132 = vmatpush1.bf16.msra.mxu0 %v96
  %133 = vmatprep.subr.bf16.mxu0 0
  %134 = vmatpush2.bf16.msra.mxu0 0
  %135 = vmatprep.subr.bf16.mxu0 0
  %136 = vmatpush2.bf16.msra.mxu0 0
  %137 = vmatprep.subr.bf16.mxu0 0
  %138 = vmatpush2.bf16.msra.mxu0 0
  %139 = vmatprep.subr.bf16.mxu0 0
  %140 = vmatpush2.bf16.msra.mxu0 0
  %141 = vmatprep.subr.bf16.mxu0 0
  %142 = vmatpush2.bf16.msra.mxu0 0
  %143 = vmatprep.subr.bf16.mxu0 0
  %144 = vmatpush2.bf16.msra.mxu0 0
  %145 = vmatprep.subr.bf16.mxu0 0
  %146 = vmatpush2.bf16.msra.mxu0 0
  %147 = vmatprep.subr.bf16.mxu0 0
  %148 = vmatpush2.bf16.msra.mxu0 0
  %149 = vmatprep.mubr.bf16.mxu0 0
  %150 = vmatmul.mubr.bf16.gmra.mxu0 %v106
  %v151 = vpop.f32.mrf.mxu0
  %v152 = vadd.f32 %v47, %v151
  %v153 = vpop.f32.mrf.mxu0
  %v154 = vadd.f32 %v51, %v153
  %v155 = vpop.f32.mrf.mxu0
  %v156 = vadd.f32 %v47, %v155
  %v157 = vpop.f32.mrf.mxu0
  %v158 = vadd.f32 %v51, %v157
  %159 = vmatprep.mubr.bf16.mxu0 0
  %160 = vmatmul.mubr.bf16.gmra.mxu0 %v109
  %v161 = vpop.f32.mrf.mxu0
  %v162 = vadd.f32 %v47, %v161
  %v163 = vpop.f32.mrf.mxu0
  %v164 = vadd.f32 %v51, %v163
  %v165 = vpop.f32.mrf.mxu0
  %v166 = vadd.f32 %v47, %v165
  %v167 = vpop.f32.mrf.mxu0
  %v168 = vadd.f32 %v51, %v167
  %169 = vmatprep.mubr.bf16.mxu0 0
  %170 = vmatmul.mubr.bf16.gmra.mxu0 %v112
  %v171 = vpop.f32.mrf.mxu0
  %v172 = vadd.f32 %v47, %v171
  %v173 = vpop.f32.mrf.mxu0
  %v174 = vadd.f32 %v51, %v173
  %v175 = vpop.f32.mrf.mxu0
  %v176 = vadd.f32 %v47, %v175
  %v177 = vpop.f32.mrf.mxu0
  %v178 = vadd.f32 %v51, %v177
  %179 = vmatprep.mubr.bf16.mxu0 0
  %180 = vmatmul.mubr.bf16.gmra.mxu0 %v115
  %v181 = vpop.f32.mrf.mxu0
  %v182 = vadd.f32 %v47, %v181
  %v183 = vpop.f32.mrf.mxu0
  %v184 = vadd.f32 %v51, %v183
  %v185 = vpop.f32.mrf.mxu0
  %v186 = vadd.f32 %v47, %v185
  %v187 = vpop.f32.mrf.mxu0
  %v188 = vadd.f32 %v51, %v187
  %189 = vdwg.mxu0
  %190 = vmatprep.subr.bf16.mxu0 0
  %191 = vmatpush1.bf16.msra.mxu0 0
  %192 = vmatprep.subr.bf16.mxu0 0
  %193 = vmatpush1.bf16.msra.mxu0 0
  %194 = vmatprep.subr.bf16.mxu0 0
  %195 = vmatpush1.bf16.msra.mxu0 0
  %196 = vmatprep.subr.bf16.mxu0 0
  %197 = vmatpush1.bf16.msra.mxu0 0
  %198 = vmatprep.subr.bf16.mxu0 0
  %199 = vmatpush1.bf16.msra.mxu0 0
  %200 = vmatprep.subr.bf16.mxu0 0
  %201 = vmatpush1.bf16.msra.mxu0 0
  %202 = vmatprep.subr.bf16.mxu0 0
  %203 = vmatpush1.bf16.msra.mxu0 0
  %204 = vmatprep.subr.bf16.mxu0 %v99
  %205 = vmatpush1.bf16.msra.mxu0 %v98
  %206 = vmatprep.subr.bf16.mxu0 0
  %207 = vmatpush2.bf16.msra.mxu0 0
  %208 = vmatprep.subr.bf16.mxu0 0
  %209 = vmatpush2.bf16.msra.mxu0 0
  %210 = vmatprep.subr.bf16.mxu0 0
  %211 = vmatpush2.bf16.msra.mxu0 0
  %212 = vmatprep.subr.bf16.mxu0 0
  %213 = vmatpush2.bf16.msra.mxu0 0
  %214 = vmatprep.subr.bf16.mxu0 0
  %215 = vmatpush2.bf16.msra.mxu0 0
  %216 = vmatprep.subr.bf16.mxu0 0
  %217 = vmatpush2.bf16.msra.mxu0 0
  %218 = vmatprep.subr.bf16.mxu0 0
  %219 = vmatpush2.bf16.msra.mxu0 0
  %220 = vmatprep.subr.bf16.mxu0 0
  %221 = vmatpush2.bf16.msra.mxu0 0
  %222 = vmatprep.mubr.bf16.mxu0 0
  %223 = vmatmul.mubr.bf16.gmra.mxu0 %v106
  %v224 = vpop.f32.mrf.mxu0
  %v225 = vadd.f32 %v55, %v224
  %v226 = vpop.f32.mrf.mxu0
  %v227 = vadd.f32 %v59, %v226
  %v228 = vpop.f32.mrf.mxu0
  %v229 = vadd.f32 %v55, %v228
  %v230 = vpop.f32.mrf.mxu0
  %v231 = vadd.f32 %v59, %v230
  %232 = vmatprep.mubr.bf16.mxu0 0
  %233 = vmatmul.mubr.bf16.gmra.mxu0 %v109
  %v234 = vpop.f32.mrf.mxu0
  %v235 = vadd.f32 %v55, %v234
  %v236 = vpop.f32.mrf.mxu0
  %v237 = vadd.f32 %v59, %v236
  %v238 = vpop.f32.mrf.mxu0
  %v239 = vadd.f32 %v55, %v238
  %v240 = vpop.f32.mrf.mxu0
  %v241 = vadd.f32 %v59, %v240
  %242 = vmatprep.mubr.bf16.mxu0 0
  %243 = vmatmul.mubr.bf16.gmra.mxu0 %v112
  %v244 = vpop.f32.mrf.mxu0
  %v245 = vadd.f32 %v55, %v244
  %v246 = vpop.f32.mrf.mxu0
  %v247 = vadd.f32 %v59, %v246
  %v248 = vpop.f32.mrf.mxu0
  %v249 = vadd.f32 %v55, %v248
  %v250 = vpop.f32.mrf.mxu0
  %v251 = vadd.f32 %v59, %v250
  %252 = vmatprep.mubr.bf16.mxu0 0
  %253 = vmatmul.mubr.bf16.gmra.mxu0 %v115
  %v254 = vpop.f32.mrf.mxu0
  %v255 = vadd.f32 %v55, %v254
  %v256 = vpop.f32.mrf.mxu0
  %v257 = vadd.f32 %v59, %v256
  %v258 = vpop.f32.mrf.mxu0
  %v259 = vadd.f32 %v55, %v258
  %v260 = vpop.f32.mrf.mxu0
  %v261 = vadd.f32 %v59, %v260
  %262 = vdwg.mxu0
  %263 = vst [vmem:[#allocation2] sm:$0xff] %v152
  %264 = vst [vmem:[#allocation2 + $0x8] sm:$0xff] %v154
  %265 = vst [vmem:[#allocation2 + $0x10] sm:$0xff] %v225
  %266 = vst [vmem:[#allocation2 + $0x18] sm:$0xff] %v227
  %267 = vst [vmem:[#allocation2 + $0x20] sm:$0xff] %v156
  %268 = vst [vmem:[#allocation2 + $0x28] sm:$0xff] %v158
  %269 = vst [vmem:[#allocation2 + $0x30] sm:$0xff] %v229
  %270 = vst [vmem:[#allocation2 + $0x38] sm:$0xff] %v231
  %271 = vst [vmem:[#allocation2 + $0x40] sm:$0xff] %v162
  %272 = vst [vmem:[#allocation2 + $0x48] sm:$0xff] %v164
  %273 = vst [vmem:[#allocation2 + $0x50] sm:$0xff] %v235
  %274 = vst [vmem:[#allocation2 + $0x58] sm:$0xff] %v237
  %275 = vst [vmem:[#allocation2 + $0x60] sm:$0xff] %v166
  %276 = vst [vmem:[#allocation2 + $0x68] sm:$0xff] %v168
  %277 = vst [vmem:[#allocation2 + $0x70] sm:$0xff] %v239
  %278 = vst [vmem:[#allocation2 + $0x78] sm:$0xff] %v241
  %279 = vst [vmem:[#allocation2 + $0x80] sm:$0xff] %v172
  %280 = vst [vmem:[#allocation2 + $0x88] sm:$0xff] %v174
  %281 = vst [vmem:[#allocation2 + $0x90] sm:$0xff] %v245
  %282 = vst [vmem:[#allocation2 + $0x98] sm:$0xff] %v247
  %283 = vst [vmem:[#allocation2 + $0xa0] sm:$0xff] %v176
  %284 = vst [vmem:[#allocation2 + $0xa8] sm:$0xff] %v178
  %285 = vst [vmem:[#allocation2 + $0xb0] sm:$0xff] %v249
  %286 = vst [vmem:[#allocation2 + $0xb8] sm:$0xff] %v251
  %287 = vst [vmem:[#allocation2 + $0xc0] sm:$0xff] %v182
  %288 = vst [vmem:[#allocation2 + $0xc8] sm:$0xff] %v184
  %289 = vst [vmem:[#allocation2 + $0xd0] sm:$0xff] %v255
  %290 = vst [vmem:[#allocation2 + $0xd8] sm:$0xff] %v257
  %291 = vst [vmem:[#allocation2 + $0xe0] sm:$0xff] %v186
  %292 = vst [vmem:[#allocation2 + $0xe8] sm:$0xff] %v188
  %293 = vst [vmem:[#allocation2 + $0xf0] sm:$0xff] %v259
  %294 = vst [vmem:[#allocation2 + $0xf8] sm:$0xff] %v261
  %v295 = vld [vmem:[#allocation3] sm:$0xff]
  %v296 = vld [vmem:[#allocation4] sm:$0xff]
  %v297 = vpack.c.bf16 %v295, %v295
  %v298 = vld [vmem:[%s3] sm:$0xff]
  %v299 = vld [vmem:[%s3 + $0x8] sm:$0xff]
  %v300 = vld [vmem:[%s3 + $0x10] sm:$0xff]
  %v301 = vld [vmem:[%s3 + $0x18] sm:$0xff]
  %v302 = vld [vmem:[%s3 + $0x20] sm:$0xff]
  %v303 = vld [vmem:[%s3 + $0x28] sm:$0xff]
  %v304 = vld [vmem:[%s3 + $0x30] sm:$0xff]
  %v305 = vld [vmem:[%s3 + $0x38] sm:$0xff]
  %v306 = vld [vmem:[%s3 + $0x40] sm:$0xff]
  %v307 = vld [vmem:[%s3 + $0x48] sm:$0xff]
  %v308 = vld [vmem:[%s3 + $0x50] sm:$0xff]
  %v309 = vld [vmem:[%s3 + $0x58] sm:$0xff]
  %v310 = vld [vmem:[%s3 + $0x60] sm:$0xff]
  %v311 = vld [vmem:[%s3 + $0x68] sm:$0xff]
  %v312 = vld [vmem:[%s3 + $0x70] sm:$0xff]
  %v313 = vld [vmem:[%s3 + $0x78] sm:$0xff]
  %v314 = vld [vmem:[%s3 + $0x80] sm:$0xff]
  %v315 = vld [vmem:[%s3 + $0x88] sm:$0xff]
  %v316 = vld [vmem:[%s3 + $0x90] sm:$0xff]
  %v317 = vld [vmem:[%s3 + $0x98] sm:$0xff]
  %v318 = vld [vmem:[%s3 + $0xa0] sm:$0xff]
  %v319 = vld [vmem:[%s3 + $0xa8] sm:$0xff]
  %v320 = vld [vmem:[%s3 + $0xb0] sm:$0xff]
  %v321 = vld [vmem:[%s3 + $0xb8] sm:$0xff]
  %v322 = vld [vmem:[%s3 + $0xc0] sm:$0xff]
  %v323 = vld [vmem:[%s3 + $0xc8] sm:$0xff]
  %v324 = vld [vmem:[%s3 + $0xd0] sm:$0xff]
  %v325 = vld [vmem:[%s3 + $0xd8] sm:$0xff]
  %v326 = vld [vmem:[%s3 + $0xe0] sm:$0xff]
  %v327 = vld [vmem:[%s3 + $0xe8] sm:$0xff]
  %v328 = vld [vmem:[%s3 + $0xf0] sm:$0xff]
  %v329 = vld [vmem:[%s3 + $0xf8] sm:$0xff]
  %v330 = vld [vmem:[#allocation2] sm:$0xff]
  %v331 = vld [vmem:[#allocation2 + $0x8] sm:$0xff]
  %v332 = vld [vmem:[#allocation2 + $0x10] sm:$0xff]
  %v333 = vld [vmem:[#allocation2 + $0x18] sm:$0xff]
  %v366 = vunpack.c.l.b16 %v298
  %v367 = vunpack.c.h.b16 %v298
  %v368 = vunpack.c.l.b16 %v299
  %v369 = vunpack.c.h.b16 %v299
  %v370 = vunpack.c.l.b16 %v300
  %v371 = vunpack.c.h.b16 %v300
  %v372 = vunpack.c.l.b16 %v301
  %v373 = vunpack.c.h.b16 %v301
  %v374 = vunpack.c.l.b16 %v302
  %v375 = vunpack.c.h.b16 %v302
  %v376 = vunpack.c.l.b16 %v303
  %v377 = vunpack.c.h.b16 %v303
  %v378 = vunpack.c.l.b16 %v304
  %v379 = vunpack.c.h.b16 %v304
  %v380 = vunpack.c.l.b16 %v305
  %v381 = vunpack.c.h.b16 %v305
  %v382 = vunpack.c.l.b16 %v306
  %v383 = vunpack.c.h.b16 %v306
  %v384 = vunpack.c.l.b16 %v307
  %v385 = vunpack.c.h.b16 %v307
  %v386 = vunpack.c.l.b16 %v308
  %v387 = vunpack.c.h.b16 %v308
  %v388 = vunpack.c.l.b16 %v309
  %v389 = vunpack.c.h.b16 %v309
  %v390 = vunpack.c.l.b16 %v310
  %v391 = vunpack.c.h.b16 %v310
  %v392 = vunpack.c.l.b16 %v311
  %v393 = vunpack.c.h.b16 %v311
  %v394 = vunpack.c.l.b16 %v312
  %v395 = vunpack.c.h.b16 %v312
  %v396 = vunpack.c.l.b16 %v313
  %v397 = vunpack.c.h.b16 %v313
  %v398 = vunpack.c.l.b16 %v314
  %v399 = vunpack.c.h.b16 %v314
  %v400 = vunpack.c.l.b16 %v315
  %v401 = vunpack.c.h.b16 %v315
  %v402 = vunpack.c.l.b16 %v316
  %v403 = vunpack.c.h.b16 %v316
  %v404 = vunpack.c.l.b16 %v317
  %v405 = vunpack.c.h.b16 %v317
  %v406 = vunpack.c.l.b16 %v318
  %v407 = vunpack.c.h.b16 %v318
  %v408 = vunpack.c.l.b16 %v319
  %v409 = vunpack.c.h.b16 %v319
  %v410 = vunpack.c.l.b16 %v320
  %v411 = vunpack.c.h.b16 %v320
  %v412 = vunpack.c.l.b16 %v321
  %v413 = vunpack.c.h.b16 %v321
  %v414 = vunpack.c.l.b16 %v322
  %v415 = vunpack.c.h.b16 %v322
  %v416 = vunpack.c.l.b16 %v323
  %v417 = vunpack.c.h.b16 %v323
  %v418 = vunpack.c.l.b16 %v324
  %v419 = vunpack.c.h.b16 %v324
  %v420 = vunpack.c.l.b16 %v325
  %v421 = vunpack.c.h.b16 %v325
  %v422 = vunpack.c.l.b16 %v326
  %v423 = vunpack.c.h.b16 %v326
  %v424 = vunpack.c.l.b16 %v327
  %v425 = vunpack.c.h.b16 %v327
  %v426 = vunpack.c.l.b16 %v328
  %v427 = vunpack.c.h.b16 %v328
  %v428 = vunpack.c.l.b16 %v329
  %v429 = vunpack.c.h.b16 %v329
  %v430 = vpack.c.b16 %v370, %v366
  %v431 = vpack.c.b16 %v371, %v367
  %v432 = vpack.c.b16 %v372, %v368
  %v433 = vpack.c.b16 %v373, %v369
  %v434 = vpack.c.b16 %v378, %v374
  %v435 = vpack.c.b16 %v379, %v375
  %v436 = vpack.c.b16 %v380, %v376
  %v437 = vpack.c.b16 %v381, %v377
  %v438 = vpack.c.b16 %v386, %v382
  %v439 = vpack.c.b16 %v387, %v383
  %v440 = vpack.c.b16 %v388, %v384
  %v441 = vpack.c.b16 %v389, %v385
  %v442 = vpack.c.b16 %v394, %v390
  %v443 = vpack.c.b16 %v395, %v391
  %v444 = vpack.c.b16 %v396, %v392
  %v445 = vpack.c.b16 %v397, %v393
  %v446 = vpack.c.b16 %v402, %v398
  %v447 = vpack.c.b16 %v403, %v399
  %v448 = vpack.c.b16 %v404, %v400
  %v449 = vpack.c.b16 %v405, %v401
  %v450 = vpack.c.b16 %v410, %v406
  %v451 = vpack.c.b16 %v411, %v407
  %v452 = vpack.c.b16 %v412, %v408
  %v453 = vpack.c.b16 %v413, %v409
  %v454 = vpack.c.b16 %v418, %v414
  %v455 = vpack.c.b16 %v419, %v415
  %v456 = vpack.c.b16 %v420, %v416
  %v457 = vpack.c.b16 %v421, %v417
  %v458 = vpack.c.b16 %v426, %v422
  %v459 = vpack.c.b16 %v427, %v423
  %v460 = vpack.c.b16 %v428, %v424
  %v461 = vpack.c.b16 %v429, %v425
  %494 = vmatprep.subr.bf16.mxu0 %v459
  %495 = vmatpush1.bf16.msra.mxu0 %v458
  %496 = vmatprep.subr.bf16.mxu0 %v455
  %497 = vmatpush1.bf16.msra.mxu0 %v454
  %498 = vmatprep.subr.bf16.mxu0 %v451
  %499 = vmatpush1.bf16.msra.mxu0 %v450
  %500 = vmatprep.subr.bf16.mxu0 %v447
  %501 = vmatpush1.bf16.msra.mxu0 %v446
  %502 = vmatprep.subr.bf16.mxu0 %v443
  %503 = vmatpush1.bf16.msra.mxu0 %v442
  %504 = vmatprep.subr.bf16.mxu0 %v439
  %505 = vmatpush1.bf16.msra.mxu0 %v438
  %506 = vmatprep.subr.bf16.mxu0 %v435
  %507 = vmatpush1.bf16.msra.mxu0 %v434
  %508 = vmatprep.subr.bf16.mxu0 %v431
  %509 = vmatpush1.bf16.msra.mxu0 %v430
  %510 = vmatprep.subr.bf16.mxu0 0
  %511 = vmatpush2.bf16.msra.mxu0 0
  %512 = vmatprep.subr.bf16.mxu0 0
  %513 = vmatpush2.bf16.msra.mxu0 0
  %514 = vmatprep.subr.bf16.mxu0 0
  %515 = vmatpush2.bf16.msra.mxu0 0
  %516 = vmatprep.subr.bf16.mxu0 0
  %517 = vmatpush2.bf16.msra.mxu0 0
  %518 = vmatprep.subr.bf16.mxu0 0
  %519 = vmatpush2.bf16.msra.mxu0 0
  %520 = vmatprep.subr.bf16.mxu0 0
  %521 = vmatpush2.bf16.msra.mxu0 0
  %522 = vmatprep.subr.bf16.mxu0 0
  %523 = vmatpush2.bf16.msra.mxu0 0
  %524 = vmatprep.subr.bf16.mxu0 0
  %525 = vmatpush2.bf16.msra.mxu0 0
  %526 = vmatprep.mubr.bf16.mxu0 0
  %527 = vmatmul.mubr.bf16.gmra.mxu0 %v297
  %v528 = vpop.f32.mrf.mxu0
  %v529 = vadd.f32 %v330, %v528
  %v530 = vpop.f32.mrf.mxu0
  %v531 = vadd.f32 %v331, %v530
  %v532 = vpop.f32.mrf.mxu0
  %v533 = vpop.f32.mrf.mxu0
  %534 = vdwg.mxu0
  %535 = vmatprep.subr.bf16.mxu0 %v461
  %536 = vmatpush1.bf16.msra.mxu0 %v460
  %537 = vmatprep.subr.bf16.mxu0 %v457
  %538 = vmatpush1.bf16.msra.mxu0 %v456
  %539 = vmatprep.subr.bf16.mxu0 %v453
  %540 = vmatpush1.bf16.msra.mxu0 %v452
  %541 = vmatprep.subr.bf16.mxu0 %v449
  %542 = vmatpush1.bf16.msra.mxu0 %v448
  %543 = vmatprep.subr.bf16.mxu0 %v445
  %544 = vmatpush1.bf16.msra.mxu0 %v444
  %545 = vmatprep.subr.bf16.mxu0 %v441
  %546 = vmatpush1.bf16.msra.mxu0 %v440
  %547 = vmatprep.subr.bf16.mxu0 %v437
  %548 = vmatpush1.bf16.msra.mxu0 %v436
  %549 = vmatprep.subr.bf16.mxu0 %v433
  %550 = vmatpush1.bf16.msra.mxu0 %v432
  %551 = vmatprep.subr.bf16.mxu0 0
  %552 = vmatpush2.bf16.msra.mxu0 0
  %553 = vmatprep.subr.bf16.mxu0 0
  %554 = vmatpush2.bf16.msra.mxu0 0
  %555 = vmatprep.subr.bf16.mxu0 0
  %556 = vmatpush2.bf16.msra.mxu0 0
  %557 = vmatprep.subr.bf16.mxu0 0
  %558 = vmatpush2.bf16.msra.mxu0 0
  %559 = vmatprep.subr.bf16.mxu0 0
  %560 = vmatpush2.bf16.msra.mxu0 0
  %561 = vmatprep.subr.bf16.mxu0 0
  %562 = vmatpush2.bf16.msra.mxu0 0
  %563 = vmatprep.subr.bf16.mxu0 0
  %564 = vmatpush2.bf16.msra.mxu0 0
  %565 = vmatprep.subr.bf16.mxu0 0
  %566 = vmatpush2.bf16.msra.mxu0 0
  %567 = vmatprep.mubr.bf16.mxu0 0
  %568 = vmatmul.mubr.bf16.gmra.mxu0 %v297
  %v569 = vpop.f32.mrf.mxu0
  %v570 = vadd.f32 %v332, %v569
  %v571 = vpop.f32.mrf.mxu0
  %v572 = vadd.f32 %v333, %v571
  %v573 = vpop.f32.mrf.mxu0
  %v574 = vpop.f32.mrf.mxu0
  %575 = vdwg.mxu0
  %v576 = vmul.f32 %v529, 0.5
  %v577 = vtanh.pop %v576
  %v578 = vadd.f32 %v577, 1.0
  %v579 = vmul.f32 %v578, 0.5
  %v580 = vmul.f32 %v531, 0.5
  %v581 = vtanh.pop %v580
  %v582 = vadd.f32 %v581, 1.0
  %v583 = vmul.f32 %v582, 0.5
  %v584 = vtanh.pop %v570
  %v585 = vmul.f32 %v572, 0.5
  %v586 = vtanh.pop %v585
  %v587 = vadd.f32 %v586, 1.0
  %v588 = vmul.f32 %v587, 0.5
  %v589 = vmul.f32 %v583, %v296
  %v590 = vmul.f32 %v579, %v584
  %v591 = vadd.f32 %v589, %v590
  %v592 = vtanh.pop %v591
  %v593 = vmul.f32 %v588, %v592
  %v594 = vpack.c.bf16 %v593, %v593
  %s595 = scalar_lea.vmem [#allocation2], 32
  %v596 = vld [vmem:[%s595] sm:$0xff]
  %v597 = vld [vmem:[%s595 + $0x8] sm:$0xff]
  %v598 = vld [vmem:[%s595 + $0x10] sm:$0xff]
  %v599 = vld [vmem:[%s595 + $0x18] sm:$0xff]
  %600 = vmatprep.subr.bf16.mxu0 %v459
  %601 = vmatpush1.bf16.msra.mxu0 %v458
  %602 = vmatprep.subr.bf16.mxu0 %v455
  %603 = vmatpush1.bf16.msra.mxu0 %v454
  %604 = vmatprep.subr.bf16.mxu0 %v451
  %605 = vmatpush1.bf16.msra.mxu0 %v450
  %606 = vmatprep.subr.bf16.mxu0 %v447
  %607 = vmatpush1.bf16.msra.mxu0 %v446
  %608 = vmatprep.subr.bf16.mxu0 %v443
  %609 = vmatpush1.bf16.msra.mxu0 %v442
  %610 = vmatprep.subr.bf16.mxu0 %v439
  %611 = vmatpush1.bf16.msra.mxu0 %v438
  %612 = vmatprep.subr.bf16.mxu0 %v435
  %613 = vmatpush1.bf16.msra.mxu0 %v434
  %614 = vmatprep.subr.bf16.mxu0 %v431
  %615 = vmatpush1.bf16.msra.mxu0 %v430
  %616 = vmatprep.subr.bf16.mxu0 0
  %617 = vmatpush2.bf16.msra.mxu0 0
  %618 = vmatprep.subr.bf16.mxu0 0
  %619 = vmatpush2.bf16.msra.mxu0 0
  %620 = vmatprep.subr.bf16.mxu0 0
  %621 = vmatpush2.bf16.msra.mxu0 0
  %622 = vmatprep.subr.bf16.mxu0 0
  %623 = vmatpush2.bf16.msra.mxu0 0
  %624 = vmatprep.subr.bf16.mxu0 0
  %625 = vmatpush2.bf16.msra.mxu0 0
  %626 = vmatprep.subr.bf16.mxu0 0
  %627 = vmatpush2.bf16.msra.mxu0 0
  %628 = vmatprep.subr.bf16.mxu0 0
  %629 = vmatpush2.bf16.msra.mxu0 0
  %630 = vmatprep.subr.bf16.mxu0 0
  %631 = vmatpush2.bf16.msra.mxu0 0
  %632 = vmatprep.mubr.bf16.mxu0 0
  %633 = vmatmul.mubr.bf16.gmra.mxu0 %v594
  %v634 = vpop.f32.mrf.mxu0
  %v635 = vadd.f32 %v596, %v634
  %v636 = vpop.f32.mrf.mxu0
  %v637 = vadd.f32 %v597, %v636
  %v638 = vpop.f32.mrf.mxu0
  %v639 = vpop.f32.mrf.mxu0
  %640 = vdwg.mxu0
  %641 = vmatprep.subr.bf16.mxu0 %v461
  %642 = vmatpush1.bf16.msra.mxu0 %v460
  %643 = vmatprep.subr.bf16.mxu0 %v457
  %644 = vmatpush1.bf16.msra.mxu0 %v456
  %645 = vmatprep.subr.bf16.mxu0 %v453
  %646 = vmatpush1.bf16.msra.mxu0 %v452
  %647 = vmatprep.subr.bf16.mxu0 %v449
  %648 = vmatpush1.bf16.msra.mxu0 %v448
  %649 = vmatprep.subr.bf16.mxu0 %v445
  %650 = vmatpush1.bf16.msra.mxu0 %v444
  %651 = vmatprep.subr.bf16.mxu0 %v441
  %652 = vmatpush1.bf16.msra.mxu0 %v440
  %653 = vmatprep.subr.bf16.mxu0 %v437
  %654 = vmatpush1.bf16.msra.mxu0 %v436
  %655 = vmatprep.subr.bf16.mxu0 %v433
  %656 = vmatpush1.bf16.msra.mxu0 %v432
  %657 = vmatprep.subr.bf16.mxu0 0
  %658 = vmatpush2.bf16.msra.mxu0 0
  %659 = vmatprep.subr.bf16.mxu0 0
  %660 = vmatpush2.bf16.msra.mxu0 0
  %661 = vmatprep.subr.bf16.mxu0 0
  %662 = vmatpush2.bf16.msra.mxu0 0
  %663 = vmatprep.subr.bf16.mxu0 0
  %664 = vmatpush2.bf16.msra.mxu0 0
  %665 = vmatprep.subr.bf16.mxu0 0
  %666 = vmatpush2.bf16.msra.mxu0 0
  %667 = vmatprep.subr.bf16.mxu0 0
  %668 = vmatpush2.bf16.msra.mxu0 0
  %669 = vmatprep.subr.bf16.mxu0 0
  %670 = vmatpush2.bf16.msra.mxu0 0
  %671 = vmatprep.subr.bf16.mxu0 0
  %672 = vmatpush2.bf16.msra.mxu0 0
  %673 = vmatprep.mubr.bf16.mxu0 0
  %674 = vmatmul.mubr.bf16.gmra.mxu0 %v594
  %v675 = vpop.f32.mrf.mxu0
  %v676 = vadd.f32 %v598, %v675
  %v677 = vpop.f32.mrf.mxu0
  %v678 = vadd.f32 %v599, %v677
  %v679 = vpop.f32.mrf.mxu0
  %v680 = vpop.f32.mrf.mxu0
  %681 = vdwg.mxu0
  %v682 = vmul.f32 %v635, 0.5
  %v683 = vtanh.pop %v682
  %v684 = vadd.f32 %v683, 1.0
  %v685 = vmul.f32 %v684, 0.5
  %v686 = vmul.f32 %v637, 0.5
  %v687 = vtanh.pop %v686
  %v688 = vadd.f32 %v687, 1.0
  %v689 = vmul.f32 %v688, 0.5
  %v690 = vtanh.pop %v676
  %v691 = vmul.f32 %v678, 0.5
  %v692 = vtanh.pop %v691
  %v693 = vadd.f32 %v692, 1.0
  %v694 = vmul.f32 %v693, 0.5
  %v695 = vmul.f32 %v689, %v591
  %v696 = vmul.f32 %v685, %v690
  %v697 = vadd.f32 %v695, %v696
  %v698 = vtanh.pop %v697
  %v699 = vmul.f32 %v694, %v698
  %v700 = vpack.c.bf16 %v699, %v699
  %s701 = scalar_lea.vmem [#allocation2], 64
  %v702 = vld [vmem:[%s701] sm:$0xff]
  %v703 = vld [vmem:[%s701 + $0x8] sm:$0xff]
  %v704 = vld [vmem:[%s701 + $0x10] sm:$0xff]
  %v705 = vld [vmem:[%s701 + $0x18] sm:$0xff]
  %706 = vmatprep.subr.bf16.mxu0 %v459
  %707 = vmatpush1.bf16.msra.mxu0 %v458
  %708 = vmatprep.subr.bf16.mxu0 %v455
  %709 = vmatpush1.bf16.msra.mxu0 %v454
  %710 = vmatprep.subr.bf16.mxu0 %v451
  %711 = vmatpush1.bf16.msra.mxu0 %v450
  %712 = vmatprep.subr.bf16.mxu0 %v447
  %713 = vmatpush1.bf16.msra.mxu0 %v446
  %714 = vmatprep.subr.bf16.mxu0 %v443
  %715 = vmatpush1.bf16.msra.mxu0 %v442
  %716 = vmatprep.subr.bf16.mxu0 %v439
  %717 = vmatpush1.bf16.msra.mxu0 %v438
  %718 = vmatprep.subr.bf16.mxu0 %v435
  %719 = vmatpush1.bf16.msra.mxu0 %v434
  %720 = vmatprep.subr.bf16.mxu0 %v431
  %721 = vmatpush1.bf16.msra.mxu0 %v430
  %722 = vmatprep.subr.bf16.mxu0 0
  %723 = vmatpush2.bf16.msra.mxu0 0
  %724 = vmatprep.subr.bf16.mxu0 0
  %725 = vmatpush2.bf16.msra.mxu0 0
  %726 = vmatprep.subr.bf16.mxu0 0
  %727 = vmatpush2.bf16.msra.mxu0 0
  %728 = vmatprep.subr.bf16.mxu0 0
  %729 = vmatpush2.bf16.msra.mxu0 0
  %730 = vmatprep.subr.bf16.mxu0 0
  %731 = vmatpush2.bf16.msra.mxu0 0
  %732 = vmatprep.subr.bf16.mxu0 0
  %733 = vmatpush2.bf16.msra.mxu0 0
  %734 = vmatprep.subr.bf16.mxu0 0
  %735 = vmatpush2.bf16.msra.mxu0 0
  %736 = vmatprep.subr.bf16.mxu0 0
  %737 = vmatpush2.bf16.msra.mxu0 0
  %738 = vmatprep.mubr.bf16.mxu0 0
  %739 = vmatmul.mubr.bf16.gmra.mxu0 %v700
  %v740 = vpop.f32.mrf.mxu0
  %v741 = vadd.f32 %v702, %v740
  %v742 = vpop.f32.mrf.mxu0
  %v743 = vadd.f32 %v703, %v742
  %v744 = vpop.f32.mrf.mxu0
  %v745 = vpop.f32.mrf.mxu0
  %746 = vdwg.mxu0
  %747 = vmatprep.subr.bf16.mxu0 %v461
  %748 = vmatpush1.bf16.msra.mxu0 %v460
  %749 = vmatprep.subr.bf16.mxu0 %v457
  %750 = vmatpush1.bf16.msra.mxu0 %v456
  %751 = vmatprep.subr.bf16.mxu0 %v453
  %752 = vmatpush1.bf16.msra.mxu0 %v452
  %753 = vmatprep.subr.bf16.mxu0 %v449
  %754 = vmatpush1.bf16.msra.mxu0 %v448
  %755 = vmatprep.subr.bf16.mxu0 %v445
  %756 = vmatpush1.bf16.msra.mxu0 %v444
  %757 = vmatprep.subr.bf16.mxu0 %v441
  %758 = vmatpush1.bf16.msra.mxu0 %v440
  %759 = vmatprep.subr.bf16.mxu0 %v437
  %760 = vmatpush1.bf16.msra.mxu0 %v436
  %761 = vmatprep.subr.bf16.mxu0 %v433
  %762 = vmatpush1.bf16.msra.mxu0 %v432
  %763 = vmatprep.subr.bf16.mxu0 0
  %764 = vmatpush2.bf16.msra.mxu0 0
  %765 = vmatprep.subr.bf16.mxu0 0
  %766 = vmatpush2.bf16.msra.mxu0 0
  %767 = vmatprep.subr.bf16.mxu0 0
  %768 = vmatpush2.bf16.msra.mxu0 0
  %769 = vmatprep.subr.bf16.mxu0 0
  %770 = vmatpush2.bf16.msra.mxu0 0
  %771 = vmatprep.subr.bf16.mxu0 0
  %772 = vmatpush2.bf16.msra.mxu0 0
  %773 = vmatprep.subr.bf16.mxu0 0
  %774 = vmatpush2.bf16.msra.mxu0 0
  %775 = vmatprep.subr.bf16.mxu0 0
  %776 = vmatpush2.bf16.msra.mxu0 0
  %777 = vmatprep.subr.bf16.mxu0 0
  %778 = vmatpush2.bf16.msra.mxu0 0
  %779 = vmatprep.mubr.bf16.mxu0 0
  %780 = vmatmul.mubr.bf16.gmra.mxu0 %v700
  %v781 = vpop.f32.mrf.mxu0
  %v782 = vadd.f32 %v704, %v781
  %v783 = vpop.f32.mrf.mxu0
  %v784 = vadd.f32 %v705, %v783
  %v785 = vpop.f32.mrf.mxu0
  %v786 = vpop.f32.mrf.mxu0
  %787 = vdwg.mxu0
  %v788 = vmul.f32 %v741, 0.5
  %v789 = vtanh.pop %v788
  %v790 = vadd.f32 %v789, 1.0
  %v791 = vmul.f32 %v790, 0.5
  %v792 = vmul.f32 %v743, 0.5
  %v793 = vtanh.pop %v792
  %v794 = vadd.f32 %v793, 1.0
  %v795 = vmul.f32 %v794, 0.5
  %v796 = vtanh.pop %v782
  %v797 = vmul.f32 %v784, 0.5
  %v798 = vtanh.pop %v797
  %v799 = vadd.f32 %v798, 1.0
  %v800 = vmul.f32 %v799, 0.5
  %v801 = vmul.f32 %v795, %v697
  %v802 = vmul.f32 %v791, %v796
  %v803 = vadd.f32 %v801, %v802
  %v804 = vtanh.pop %v803
  %v805 = vmul.f32 %v800, %v804
  %v806 = vpack.c.bf16 %v805, %v805
  %s807 = scalar_lea.vmem [#allocation2], 96
  %v808 = vld [vmem:[%s807] sm:$0xff]
  %v809 = vld [vmem:[%s807 + $0x8] sm:$0xff]
  %v810 = vld [vmem:[%s807 + $0x10] sm:$0xff]
  %v811 = vld [vmem:[%s807 + $0x18] sm:$0xff]
  %812 = vmatprep.subr.bf16.mxu0 %v459
  %813 = vmatpush1.bf16.msra.mxu0 %v458
  %814 = vmatprep.subr.bf16.mxu0 %v455
  %815 = vmatpush1.bf16.msra.mxu0 %v454
  %816 = vmatprep.subr.bf16.mxu0 %v451
  %817 = vmatpush1.bf16.msra.mxu0 %v450
  %818 = vmatprep.subr.bf16.mxu0 %v447
  %819 = vmatpush1.bf16.msra.mxu0 %v446
  %820 = vmatprep.subr.bf16.mxu0 %v443
  %821 = vmatpush1.bf16.msra.mxu0 %v442
  %822 = vmatprep.subr.bf16.mxu0 %v439
  %823 = vmatpush1.bf16.msra.mxu0 %v438
  %824 = vmatprep.subr.bf16.mxu0 %v435
  %825 = vmatpush1.bf16.msra.mxu0 %v434
  %826 = vmatprep.subr.bf16.mxu0 %v431
  %827 = vmatpush1.bf16.msra.mxu0 %v430
  %828 = vmatprep.subr.bf16.mxu0 0
  %829 = vmatpush2.bf16.msra.mxu0 0
  %830 = vmatprep.subr.bf16.mxu0 0
  %831 = vmatpush2.bf16.msra.mxu0 0
  %832 = vmatprep.subr.bf16.mxu0 0
  %833 = vmatpush2.bf16.msra.mxu0 0
  %834 = vmatprep.subr.bf16.mxu0 0
  %835 = vmatpush2.bf16.msra.mxu0 0
  %836 = vmatprep.subr.bf16.mxu0 0
  %837 = vmatpush2.bf16.msra.mxu0 0
  %838 = vmatprep.subr.bf16.mxu0 0
  %839 = vmatpush2.bf16.msra.mxu0 0
  %840 = vmatprep.subr.bf16.mxu0 0
  %841 = vmatpush2.bf16.msra.mxu0 0
  %842 = vmatprep.subr.bf16.mxu0 0
  %843 = vmatpush2.bf16.msra.mxu0 0
  %844 = vmatprep.mubr.bf16.mxu0 0
  %845 = vmatmul.mubr.bf16.gmra.mxu0 %v806
  %v846 = vpop.f32.mrf.mxu0
  %v847 = vadd.f32 %v808, %v846
  %v848 = vpop.f32.mrf.mxu0
  %v849 = vadd.f32 %v809, %v848
  %v850 = vpop.f32.mrf.mxu0
  %v851 = vpop.f32.mrf.mxu0
  %852 = vdwg.mxu0
  %853 = vmatprep.subr.bf16.mxu0 %v461
  %854 = vmatpush1.bf16.msra.mxu0 %v460
  %855 = vmatprep.subr.bf16.mxu0 %v457
  %856 = vmatpush1.bf16.msra.mxu0 %v456
  %857 = vmatprep.subr.bf16.mxu0 %v453
  %858 = vmatpush1.bf16.msra.mxu0 %v452
  %859 = vmatprep.subr.bf16.mxu0 %v449
  %860 = vmatpush1.bf16.msra.mxu0 %v448
  %861 = vmatprep.subr.bf16.mxu0 %v445
  %862 = vmatpush1.bf16.msra.mxu0 %v444
  %863 = vmatprep.subr.bf16.mxu0 %v441
  %864 = vmatpush1.bf16.msra.mxu0 %v440
  %865 = vmatprep.subr.bf16.mxu0 %v437
  %866 = vmatpush1.bf16.msra.mxu0 %v436
  %867 = vmatprep.subr.bf16.mxu0 %v433
  %868 = vmatpush1.bf16.msra.mxu0 %v432
  %869 = vmatprep.subr.bf16.mxu0 0
  %870 = vmatpush2.bf16.msra.mxu0 0
  %871 = vmatprep.subr.bf16.mxu0 0
  %872 = vmatpush2.bf16.msra.mxu0 0
  %873 = vmatprep.subr.bf16.mxu0 0
  %874 = vmatpush2.bf16.msra.mxu0 0
  %875 = vmatprep.subr.bf16.mxu0 0
  %876 = vmatpush2.bf16.msra.mxu0 0
  %877 = vmatprep.subr.bf16.mxu0 0
  %878 = vmatpush2.bf16.msra.mxu0 0
  %879 = vmatprep.subr.bf16.mxu0 0
  %880 = vmatpush2.bf16.msra.mxu0 0
  %881 = vmatprep.subr.bf16.mxu0 0
  %882 = vmatpush2.bf16.msra.mxu0 0
  %883 = vmatprep.subr.bf16.mxu0 0
  %884 = vmatpush2.bf16.msra.mxu0 0
  %885 = vmatprep.mubr.bf16.mxu0 0
  %886 = vmatmul.mubr.bf16.gmra.mxu0 %v806
  %v887 = vpop.f32.mrf.mxu0
  %v888 = vadd.f32 %v810, %v887
  %v889 = vpop.f32.mrf.mxu0
  %v890 = vadd.f32 %v811, %v889
  %v891 = vpop.f32.mrf.mxu0
  %v892 = vpop.f32.mrf.mxu0
  %893 = vdwg.mxu0
  %v894 = vmul.f32 %v847, 0.5
  %v895 = vtanh.pop %v894
  %v896 = vadd.f32 %v895, 1.0
  %v897 = vmul.f32 %v896, 0.5
  %v898 = vmul.f32 %v849, 0.5
  %v899 = vtanh.pop %v898
  %v900 = vadd.f32 %v899, 1.0
  %v901 = vmul.f32 %v900, 0.5
  %v902 = vtanh.pop %v888
  %v903 = vmul.f32 %v890, 0.5
  %v904 = vtanh.pop %v903
  %v905 = vadd.f32 %v904, 1.0
  %v906 = vmul.f32 %v905, 0.5
  %v907 = vmul.f32 %v901, %v803
  %v908 = vmul.f32 %v897, %v902
  %v909 = vadd.f32 %v907, %v908
  %v910 = vtanh.pop %v909
  %v911 = vmul.f32 %v906, %v910
  %v912 = vpack.c.bf16 %v911, %v911
  %s913 = scalar_lea.vmem [#allocation2], 128
  %v914 = vld [vmem:[%s913] sm:$0xff]
  %v915 = vld [vmem:[%s913 + $0x8] sm:$0xff]
  %v916 = vld [vmem:[%s913 + $0x10] sm:$0xff]
  %v917 = vld [vmem:[%s913 + $0x18] sm:$0xff]
  %918 = vmatprep.subr.bf16.mxu0 %v459
  %919 = vmatpush1.bf16.msra.mxu0 %v458
  %920 = vmatprep.subr.bf16.mxu0 %v455
  %921 = vmatpush1.bf16.msra.mxu0 %v454
  %922 = vmatprep.subr.bf16.mxu0 %v451
  %923 = vmatpush1.bf16.msra.mxu0 %v450
  %924 = vmatprep.subr.bf16.mxu0 %v447
  %925 = vmatpush1.bf16.msra.mxu0 %v446
  %926 = vmatprep.subr.bf16.mxu0 %v443
  %927 = vmatpush1.bf16.msra.mxu0 %v442
  %928 = vmatprep.subr.bf16.mxu0 %v439
  %929 = vmatpush1.bf16.msra.mxu0 %v438
  %930 = vmatprep.subr.bf16.mxu0 %v435
  %931 = vmatpush1.bf16.msra.mxu0 %v434
  %932 = vmatprep.subr.bf16.mxu0 %v431
  %933 = vmatpush1.bf16.msra.mxu0 %v430
  %934 = vmatprep.subr.bf16.mxu0 0
  %935 = vmatpush2.bf16.msra.mxu0 0
  %936 = vmatprep.subr.bf16.mxu0 0
  %937 = vmatpush2.bf16.msra.mxu0 0
  %938 = vmatprep.subr.bf16.mxu0 0
  %939 = vmatpush2.bf16.msra.mxu0 0
  %940 = vmatprep.subr.bf16.mxu0 0
  %941 = vmatpush2.bf16.msra.mxu0 0
  %942 = vmatprep.subr.bf16.mxu0 0
  %943 = vmatpush2.bf16.msra.mxu0 0
  %944 = vmatprep.subr.bf16.mxu0 0
  %945 = vmatpush2.bf16.msra.mxu0 0
  %946 = vmatprep.subr.bf16.mxu0 0
  %947 = vmatpush2.bf16.msra.mxu0 0
  %948 = vmatprep.subr.bf16.mxu0 0
  %949 = vmatpush2.bf16.msra.mxu0 0
  %950 = vmatprep.mubr.bf16.mxu0 0
  %951 = vmatmul.mubr.bf16.gmra.mxu0 %v912
  %v952 = vpop.f32.mrf.mxu0
  %v953 = vadd.f32 %v914, %v952
  %v954 = vpop.f32.mrf.mxu0
  %v955 = vadd.f32 %v915, %v954
  %v956 = vpop.f32.mrf.mxu0
  %v957 = vpop.f32.mrf.mxu0
  %958 = vdwg.mxu0
  %959 = vmatprep.subr.bf16.mxu0 %v461
  %960 = vmatpush1.bf16.msra.mxu0 %v460
  %961 = vmatprep.subr.bf16.mxu0 %v457
  %962 = vmatpush1.bf16.msra.mxu0 %v456
  %963 = vmatprep.subr.bf16.mxu0 %v453
  %964 = vmatpush1.bf16.msra.mxu0 %v452
  %965 = vmatprep.subr.bf16.mxu0 %v449
  %966 = vmatpush1.bf16.msra.mxu0 %v448
  %967 = vmatprep.subr.bf16.mxu0 %v445
  %968 = vmatpush1.bf16.msra.mxu0 %v444
  %969 = vmatprep.subr.bf16.mxu0 %v441
  %970 = vmatpush1.bf16.msra.mxu0 %v440
  %971 = vmatprep.subr.bf16.mxu0 %v437
  %972 = vmatpush1.bf16.msra.mxu0 %v436
  %973 = vmatprep.subr.bf16.mxu0 %v433
  %974 = vmatpush1.bf16.msra.mxu0 %v432
  %975 = vmatprep.subr.bf16.mxu0 0
  %976 = vmatpush2.bf16.msra.mxu0 0
  %977 = vmatprep.subr.bf16.mxu0 0
  %978 = vmatpush2.bf16.msra.mxu0 0
  %979 = vmatprep.subr.bf16.mxu0 0
  %980 = vmatpush2.bf16.msra.mxu0 0
  %981 = vmatprep.subr.bf16.mxu0 0
  %982 = vmatpush2.bf16.msra.mxu0 0
  %983 = vmatprep.subr.bf16.mxu0 0
  %984 = vmatpush2.bf16.msra.mxu0 0
  %985 = vmatprep.subr.bf16.mxu0 0
  %986 = vmatpush2.bf16.msra.mxu0 0
  %987 = vmatprep.subr.bf16.mxu0 0
  %988 = vmatpush2.bf16.msra.mxu0 0
  %989 = vmatprep.subr.bf16.mxu0 0
  %990 = vmatpush2.bf16.msra.mxu0 0
  %991 = vmatprep.mubr.bf16.mxu0 0
  %992 = vmatmul.mubr.bf16.gmra.mxu0 %v912
  %v993 = vpop.f32.mrf.mxu0
  %v994 = vadd.f32 %v916, %v993
  %v995 = vpop.f32.mrf.mxu0
  %v996 = vadd.f32 %v917, %v995
  %v997 = vpop.f32.mrf.mxu0
  %v998 = vpop.f32.mrf.mxu0
  %999 = vdwg.mxu0
  %v1000 = vmul.f32 %v953, 0.5
  %v1001 = vtanh.pop %v1000
  %v1002 = vadd.f32 %v1001, 1.0
  %v1003 = vmul.f32 %v1002, 0.5
  %v1004 = vmul.f32 %v955, 0.5
  %v1005 = vtanh.pop %v1004
  %v1006 = vadd.f32 %v1005, 1.0
  %v1007 = vmul.f32 %v1006, 0.5
  %v1008 = vtanh.pop %v994
  %v1009 = vmul.f32 %v996, 0.5
  %v1010 = vtanh.pop %v1009
  %v1011 = vadd.f32 %v1010, 1.0
  %v1012 = vmul.f32 %v1011, 0.5
  %v1013 = vmul.f32 %v1007, %v909
  %v1014 = vmul.f32 %v1003, %v1008
  %v1015 = vadd.f32 %v1013, %v1014
  %v1016 = vtanh.pop %v1015
  %v1017 = vmul.f32 %v1012, %v1016
  %v1018 = vpack.c.bf16 %v1017, %v1017
  %s1019 = scalar_lea.vmem [#allocation2], 160
  %v1020 = vld [vmem:[%s1019] sm:$0xff]
  %v1021 = vld [vmem:[%s1019 + $0x8] sm:$0xff]
  %v1022 = vld [vmem:[%s1019 + $0x10] sm:$0xff]
  %v1023 = vld [vmem:[%s1019 + $0x18] sm:$0xff]
  %1024 = vmatprep.subr.bf16.mxu0 %v459
  %1025 = vmatpush1.bf16.msra.mxu0 %v458
  %1026 = vmatprep.subr.bf16.mxu0 %v455
  %1027 = vmatpush1.bf16.msra.mxu0 %v454
  %1028 = vmatprep.subr.bf16.mxu0 %v451
  %1029 = vmatpush1.bf16.msra.mxu0 %v450
  %1030 = vmatprep.subr.bf16.mxu0 %v447
  %1031 = vmatpush1.bf16.msra.mxu0 %v446
  %1032 = vmatprep.subr.bf16.mxu0 %v443
  %1033 = vmatpush1.bf16.msra.mxu0 %v442
  %1034 = vmatprep.subr.bf16.mxu0 %v439
  %1035 = vmatpush1.bf16.msra.mxu0 %v438
  %1036 = vmatprep.subr.bf16.mxu0 %v435
  %1037 = vmatpush1.bf16.msra.mxu0 %v434
  %1038 = vmatprep.subr.bf16.mxu0 %v431
  %1039 = vmatpush1.bf16.msra.mxu0 %v430
  %1040 = vmatprep.subr.bf16.mxu0 0
  %1041 = vmatpush2.bf16.msra.mxu0 0
  %1042 = vmatprep.subr.bf16.mxu0 0
  %1043 = vmatpush2.bf16.msra.mxu0 0
  %1044 = vmatprep.subr.bf16.mxu0 0
  %1045 = vmatpush2.bf16.msra.mxu0 0
  %1046 = vmatprep.subr.bf16.mxu0 0
  %1047 = vmatpush2.bf16.msra.mxu0 0
  %1048 = vmatprep.subr.bf16.mxu0 0
  %1049 = vmatpush2.bf16.msra.mxu0 0
  %1050 = vmatprep.subr.bf16.mxu0 0
  %1051 = vmatpush2.bf16.msra.mxu0 0
  %1052 = vmatprep.subr.bf16.mxu0 0
  %1053 = vmatpush2.bf16.msra.mxu0 0
  %1054 = vmatprep.subr.bf16.mxu0 0
  %1055 = vmatpush2.bf16.msra.mxu0 0
  %1056 = vmatprep.mubr.bf16.mxu0 0
  %1057 = vmatmul.mubr.bf16.gmra.mxu0 %v1018
  %v1058 = vpop.f32.mrf.mxu0
  %v1059 = vadd.f32 %v1020, %v1058
  %v1060 = vpop.f32.mrf.mxu0
  %v1061 = vadd.f32 %v1021, %v1060
  %v1062 = vpop.f32.mrf.mxu0
  %v1063 = vpop.f32.mrf.mxu0
  %1064 = vdwg.mxu0
  %1065 = vmatprep.subr.bf16.mxu0 %v461
  %1066 = vmatpush1.bf16.msra.mxu0 %v460
  %1067 = vmatprep.subr.bf16.mxu0 %v457
  %1068 = vmatpush1.bf16.msra.mxu0 %v456
  %1069 = vmatprep.subr.bf16.mxu0 %v453
  %1070 = vmatpush1.bf16.msra.mxu0 %v452
  %1071 = vmatprep.subr.bf16.mxu0 %v449
  %1072 = vmatpush1.bf16.msra.mxu0 %v448
  %1073 = vmatprep.subr.bf16.mxu0 %v445
  %1074 = vmatpush1.bf16.msra.mxu0 %v444
  %1075 = vmatprep.subr.bf16.mxu0 %v441
  %1076 = vmatpush1.bf16.msra.mxu0 %v440
  %1077 = vmatprep.subr.bf16.mxu0 %v437
  %1078 = vmatpush1.bf16.msra.mxu0 %v436
  %1079 = vmatprep.subr.bf16.mxu0 %v433
  %1080 = vmatpush1.bf16.msra.mxu0 %v432
  %1081 = vmatprep.subr.bf16.mxu0 0
  %1082 = vmatpush2.bf16.msra.mxu0 0
  %1083 = vmatprep.subr.bf16.mxu0 0
  %1084 = vmatpush2.bf16.msra.mxu0 0
  %1085 = vmatprep.subr.bf16.mxu0 0
  %1086 = vmatpush2.bf16.msra.mxu0 0
  %1087 = vmatprep.subr.bf16.mxu0 0
  %1088 = vmatpush2.bf16.msra.mxu0 0
  %1089 = vmatprep.subr.bf16.mxu0 0
  %1090 = vmatpush2.bf16.msra.mxu0 0
  %1091 = vmatprep.subr.bf16.mxu0 0
  %1092 = vmatpush2.bf16.msra.mxu0 0
  %1093 = vmatprep.subr.bf16.mxu0 0
  %1094 = vmatpush2.bf16.msra.mxu0 0
  %1095 = vmatprep.subr.bf16.mxu0 0
  %1096 = vmatpush2.bf16.msra.mxu0 0
  %1097 = vmatprep.mubr.bf16.mxu0 0
  %1098 = vmatmul.mubr.bf16.gmra.mxu0 %v1018
  %v1099 = vpop.f32.mrf.mxu0
  %v1100 = vadd.f32 %v1022, %v1099
  %v1101 = vpop.f32.mrf.mxu0
  %v1102 = vadd.f32 %v1023, %v1101
  %v1103 = vpop.f32.mrf.mxu0
  %v1104 = vpop.f32.mrf.mxu0
  %1105 = vdwg.mxu0
  %v1106 = vmul.f32 %v1059, 0.5
  %v1107 = vtanh.pop %v1106
  %v1108 = vadd.f32 %v1107, 1.0
  %v1109 = vmul.f32 %v1108, 0.5
  %v1110 = vmul.f32 %v1061, 0.5
  %v1111 = vtanh.pop %v1110
  %v1112 = vadd.f32 %v1111, 1.0
  %v1113 = vmul.f32 %v1112, 0.5
  %v1114 = vtanh.pop %v1100
  %v1115 = vmul.f32 %v1102, 0.5
  %v1116 = vtanh.pop %v1115
  %v1117 = vadd.f32 %v1116, 1.0
  %v1118 = vmul.f32 %v1117, 0.5
  %v1119 = vmul.f32 %v1113, %v1015
  %v1120 = vmul.f32 %v1109, %v1114
  %v1121 = vadd.f32 %v1119, %v1120
  %v1122 = vtanh.pop %v1121
  %v1123 = vmul.f32 %v1118, %v1122
  %v1124 = vpack.c.bf16 %v1123, %v1123
  %s1125 = scalar_lea.vmem [#allocation2], 192
  %v1126 = vld [vmem:[%s1125] sm:$0xff]
  %v1127 = vld [vmem:[%s1125 + $0x8] sm:$0xff]
  %v1128 = vld [vmem:[%s1125 + $0x10] sm:$0xff]
  %v1129 = vld [vmem:[%s1125 + $0x18] sm:$0xff]
  %1130 = vmatprep.subr.bf16.mxu0 %v459
  %1131 = vmatpush1.bf16.msra.mxu0 %v458
  %1132 = vmatprep.subr.bf16.mxu0 %v455
  %1133 = vmatpush1.bf16.msra.mxu0 %v454
  %1134 = vmatprep.subr.bf16.mxu0 %v451
  %1135 = vmatpush1.bf16.msra.mxu0 %v450
  %1136 = vmatprep.subr.bf16.mxu0 %v447
  %1137 = vmatpush1.bf16.msra.mxu0 %v446
  %1138 = vmatprep.subr.bf16.mxu0 %v443
  %1139 = vmatpush1.bf16.msra.mxu0 %v442
  %1140 = vmatprep.subr.bf16.mxu0 %v439
  %1141 = vmatpush1.bf16.msra.mxu0 %v438
  %1142 = vmatprep.subr.bf16.mxu0 %v435
  %1143 = vmatpush1.bf16.msra.mxu0 %v434
  %1144 = vmatprep.subr.bf16.mxu0 %v431
  %1145 = vmatpush1.bf16.msra.mxu0 %v430
  %1146 = vmatprep.subr.bf16.mxu0 0
  %1147 = vmatpush2.bf16.msra.mxu0 0
  %1148 = vmatprep.subr.bf16.mxu0 0
  %1149 = vmatpush2.bf16.msra.mxu0 0
  %1150 = vmatprep.subr.bf16.mxu0 0
  %1151 = vmatpush2.bf16.msra.mxu0 0
  %1152 = vmatprep.subr.bf16.mxu0 0
  %1153 = vmatpush2.bf16.msra.mxu0 0
  %1154 = vmatprep.subr.bf16.mxu0 0
  %1155 = vmatpush2.bf16.msra.mxu0 0
  %1156 = vmatprep.subr.bf16.mxu0 0
  %1157 = vmatpush2.bf16.msra.mxu0 0
  %1158 = vmatprep.subr.bf16.mxu0 0
  %1159 = vmatpush2.bf16.msra.mxu0 0
  %1160 = vmatprep.subr.bf16.mxu0 0
  %1161 = vmatpush2.bf16.msra.mxu0 0
  %1162 = vmatprep.mubr.bf16.mxu0 0
  %1163 = vmatmul.mubr.bf16.gmra.mxu0 %v1124
  %v1164 = vpop.f32.mrf.mxu0
  %v1165 = vadd.f32 %v1126, %v1164
  %v1166 = vpop.f32.mrf.mxu0
  %v1167 = vadd.f32 %v1127, %v1166
  %v1168 = vpop.f32.mrf.mxu0
  %v1169 = vpop.f32.mrf.mxu0
  %1170 = vdwg.mxu0
  %1171 = vmatprep.subr.bf16.mxu0 %v461
  %1172 = vmatpush1.bf16.msra.mxu0 %v460
  %1173 = vmatprep.subr.bf16.mxu0 %v457
  %1174 = vmatpush1.bf16.msra.mxu0 %v456
  %1175 = vmatprep.subr.bf16.mxu0 %v453
  %1176 = vmatpush1.bf16.msra.mxu0 %v452
  %1177 = vmatprep.subr.bf16.mxu0 %v449
  %1178 = vmatpush1.bf16.msra.mxu0 %v448
  %1179 = vmatprep.subr.bf16.mxu0 %v445
  %1180 = vmatpush1.bf16.msra.mxu0 %v444
  %1181 = vmatprep.subr.bf16.mxu0 %v441
  %1182 = vmatpush1.bf16.msra.mxu0 %v440
  %1183 = vmatprep.subr.bf16.mxu0 %v437
  %1184 = vmatpush1.bf16.msra.mxu0 %v436
  %1185 = vmatprep.subr.bf16.mxu0 %v433
  %1186 = vmatpush1.bf16.msra.mxu0 %v432
  %1187 = vmatprep.subr.bf16.mxu0 0
  %1188 = vmatpush2.bf16.msra.mxu0 0
  %1189 = vmatprep.subr.bf16.mxu0 0
  %1190 = vmatpush2.bf16.msra.mxu0 0
  %1191 = vmatprep.subr.bf16.mxu0 0
  %1192 = vmatpush2.bf16.msra.mxu0 0
  %1193 = vmatprep.subr.bf16.mxu0 0
  %1194 = vmatpush2.bf16.msra.mxu0 0
  %1195 = vmatprep.subr.bf16.mxu0 0
  %1196 = vmatpush2.bf16.msra.mxu0 0
  %1197 = vmatprep.subr.bf16.mxu0 0
  %1198 = vmatpush2.bf16.msra.mxu0 0
  %1199 = vmatprep.subr.bf16.mxu0 0
  %1200 = vmatpush2.bf16.msra.mxu0 0
  %1201 = vmatprep.subr.bf16.mxu0 0
  %1202 = vmatpush2.bf16.msra.mxu0 0
  %1203 = vmatprep.mubr.bf16.mxu0 0
  %1204 = vmatmul.mubr.bf16.gmra.mxu0 %v1124
  %v1205 = vpop.f32.mrf.mxu0
  %v1206 = vadd.f32 %v1128, %v1205
  %v1207 = vpop.f32.mrf.mxu0
  %v1208 = vadd.f32 %v1129, %v1207
  %v1209 = vpop.f32.mrf.mxu0
  %v1210 = vpop.f32.mrf.mxu0
  %1211 = vdwg.mxu0
  %v1212 = vmul.f32 %v1165, 0.5
  %v1213 = vtanh.pop %v1212
  %v1214 = vadd.f32 %v1213, 1.0
  %v1215 = vmul.f32 %v1214, 0.5
  %v1216 = vmul.f32 %v1167, 0.5
  %v1217 = vtanh.pop %v1216
  %v1218 = vadd.f32 %v1217, 1.0
  %v1219 = vmul.f32 %v1218, 0.5
  %v1220 = vtanh.pop %v1206
  %v1221 = vmul.f32 %v1208, 0.5
  %v1222 = vtanh.pop %v1221
  %v1223 = vadd.f32 %v1222, 1.0
  %v1224 = vmul.f32 %v1223, 0.5
  %v1225 = vmul.f32 %v1219, %v1121
  %v1226 = vmul.f32 %v1215, %v1220
  %v1227 = vadd.f32 %v1225, %v1226
  %v1228 = vtanh.pop %v1227
  %v1229 = vmul.f32 %v1224, %v1228
  %v1230 = vpack.c.bf16 %v1229, %v1229
  %s1231 = scalar_lea.vmem [#allocation2], 224
  %v1232 = vld [vmem:[%s1231] sm:$0xff]
  %v1233 = vld [vmem:[%s1231 + $0x8] sm:$0xff]
  %v1234 = vld [vmem:[%s1231 + $0x10] sm:$0xff]
  %v1235 = vld [vmem:[%s1231 + $0x18] sm:$0xff]
  %1236 = vmatprep.subr.bf16.mxu0 %v459
  %1237 = vmatpush1.bf16.msra.mxu0 %v458
  %1238 = vmatprep.subr.bf16.mxu0 %v455
  %1239 = vmatpush1.bf16.msra.mxu0 %v454
  %1240 = vmatprep.subr.bf16.mxu0 %v451
  %1241 = vmatpush1.bf16.msra.mxu0 %v450
  %1242 = vmatprep.subr.bf16.mxu0 %v447
  %1243 = vmatpush1.bf16.msra.mxu0 %v446
  %1244 = vmatprep.subr.bf16.mxu0 %v443
  %1245 = vmatpush1.bf16.msra.mxu0 %v442
  %1246 = vmatprep.subr.bf16.mxu0 %v439
  %1247 = vmatpush1.bf16.msra.mxu0 %v438
  %1248 = vmatprep.subr.bf16.mxu0 %v435
  %1249 = vmatpush1.bf16.msra.mxu0 %v434
  %1250 = vmatprep.subr.bf16.mxu0 %v431
  %1251 = vmatpush1.bf16.msra.mxu0 %v430
  %1252 = vmatprep.subr.bf16.mxu0 0
  %1253 = vmatpush2.bf16.msra.mxu0 0
  %1254 = vmatprep.subr.bf16.mxu0 0
  %1255 = vmatpush2.bf16.msra.mxu0 0
  %1256 = vmatprep.subr.bf16.mxu0 0
  %1257 = vmatpush2.bf16.msra.mxu0 0
  %1258 = vmatprep.subr.bf16.mxu0 0
  %1259 = vmatpush2.bf16.msra.mxu0 0
  %1260 = vmatprep.subr.bf16.mxu0 0
  %1261 = vmatpush2.bf16.msra.mxu0 0
  %1262 = vmatprep.subr.bf16.mxu0 0
  %1263 = vmatpush2.bf16.msra.mxu0 0
  %1264 = vmatprep.subr.bf16.mxu0 0
  %1265 = vmatpush2.bf16.msra.mxu0 0
  %1266 = vmatprep.subr.bf16.mxu0 0
  %1267 = vmatpush2.bf16.msra.mxu0 0
  %1268 = vmatprep.mubr.bf16.mxu0 0
  %1269 = vmatmul.mubr.bf16.gmra.mxu0 %v1230
  %v1270 = vpop.f32.mrf.mxu0
  %v1271 = vadd.f32 %v1232, %v1270
  %v1272 = vpop.f32.mrf.mxu0
  %v1273 = vadd.f32 %v1233, %v1272
  %v1274 = vpop.f32.mrf.mxu0
  %v1275 = vpop.f32.mrf.mxu0
  %1276 = vdwg.mxu0
  %1277 = vmatprep.subr.bf16.mxu0 %v461
  %1278 = vmatpush1.bf16.msra.mxu0 %v460
  %1279 = vmatprep.subr.bf16.mxu0 %v457
  %1280 = vmatpush1.bf16.msra.mxu0 %v456
  %1281 = vmatprep.subr.bf16.mxu0 %v453
  %1282 = vmatpush1.bf16.msra.mxu0 %v452
  %1283 = vmatprep.subr.bf16.mxu0 %v449
  %1284 = vmatpush1.bf16.msra.mxu0 %v448
  %1285 = vmatprep.subr.bf16.mxu0 %v445
  %1286 = vmatpush1.bf16.msra.mxu0 %v444
  %1287 = vmatprep.subr.bf16.mxu0 %v441
  %1288 = vmatpush1.bf16.msra.mxu0 %v440
  %1289 = vmatprep.subr.bf16.mxu0 %v437
  %1290 = vmatpush1.bf16.msra.mxu0 %v436
  %1291 = vmatprep.subr.bf16.mxu0 %v433
  %1292 = vmatpush1.bf16.msra.mxu0 %v432
  %1293 = vmatprep.subr.bf16.mxu0 0
  %1294 = vmatpush2.bf16.msra.mxu0 0
  %1295 = vmatprep.subr.bf16.mxu0 0
  %1296 = vmatpush2.bf16.msra.mxu0 0
  %1297 = vmatprep.subr.bf16.mxu0 0
  %1298 = vmatpush2.bf16.msra.mxu0 0
  %1299 = vmatprep.subr.bf16.mxu0 0
  %1300 = vmatpush2.bf16.msra.mxu0 0
  %1301 = vmatprep.subr.bf16.mxu0 0
  %1302 = vmatpush2.bf16.msra.mxu0 0
  %1303 = vmatprep.subr.bf16.mxu0 0
  %1304 = vmatpush2.bf16.msra.mxu0 0
  %1305 = vmatprep.subr.bf16.mxu0 0
  %1306 = vmatpush2.bf16.msra.mxu0 0
  %1307 = vmatprep.subr.bf16.mxu0 0
  %1308 = vmatpush2.bf16.msra.mxu0 0
  %1309 = vmatprep.mubr.bf16.mxu0 0
  %1310 = vmatmul.mubr.bf16.gmra.mxu0 %v1230
  %v1311 = vpop.f32.mrf.mxu0
  %v1312 = vadd.f32 %v1234, %v1311
  %v1313 = vpop.f32.mrf.mxu0
  %v1314 = vadd.f32 %v1235, %v1313
  %v1315 = vpop.f32.mrf.mxu0
  %v1316 = vpop.f32.mrf.mxu0
  %1317 = vdwg.mxu0
  %v1318 = vmul.f32 %v1271, 0.5
  %v1319 = vtanh.pop %v1318
  %v1320 = vadd.f32 %v1319, 1.0
  %v1321 = vmul.f32 %v1320, 0.5
  %v1322 = vmul.f32 %v1273, 0.5
  %v1323 = vtanh.pop %v1322
  %v1324 = vadd.f32 %v1323, 1.0
  %v1325 = vmul.f32 %v1324, 0.5
  %v1326 = vtanh.pop %v1312
  %v1327 = vmul.f32 %v1314, 0.5
  %v1328 = vtanh.pop %v1327
  %v1329 = vadd.f32 %v1328, 1.0
  %v1330 = vmul.f32 %v1329, 0.5
  %v1331 = vmul.f32 %v1325, %v1227
  %v1332 = vmul.f32 %v1321, %v1326
  %v1333 = vadd.f32 %v1331, %v1332
  %v1334 = vtanh.pop %v1333
  %v1335 = vmul.f32 %v1330, %v1334
  %1336 = vst [vmem:[#allocation3] sm:$0xff] %v1335
  %1337 = vst [vmem:[#allocation4] sm:$0xff] %v1333
  // Predicated region
  $region30: #{lstm_model_forward.1} parent=0 // pred_check
    %p1338 = pneg %p24
  $region31: #{lstm_model_forward.1} parent=0 // pred_check_branch
    %1340 = sbr.rel (%p1338) target = $region33
  $region32: #{lstm_model_forward.1} parent=0 // pred_region
    %v1341 = vld [vmem:[%s4] sm:$0xff]
    %v1342 = vld [vmem:[%s4 + $0x8] sm:$0xff]
    %v1343 = vld [vmem:[%s4 + $0x10] sm:$0xff]
    %v1344 = vld [vmem:[%s4 + $0x18] sm:$0xff]
    %v1345 = vld [vmem:[%s4 + $0x20] sm:$0xff]
    %v1346 = vld [vmem:[%s4 + $0x28] sm:$0xff]
    %v1347 = vld [vmem:[%s4 + $0x30] sm:$0xff]
    %v1348 = vld [vmem:[%s4 + $0x38] sm:$0xff]
    %v1349 = vld [vmem:[%s4 + $0x40] sm:$0xff]
    %v1350 = vld [vmem:[%s4 + $0x48] sm:$0xff]
    %v1351 = vld [vmem:[%s4 + $0x50] sm:$0xff]
    %v1352 = vld [vmem:[%s4 + $0x58] sm:$0xff]
    %v1353 = vld [vmem:[%s4 + $0x60] sm:$0xff]
    %v1354 = vld [vmem:[%s4 + $0x68] sm:$0xff]
    %v1355 = vld [vmem:[%s4 + $0x70] sm:$0xff]
    %v1356 = vld [vmem:[%s4 + $0x78] sm:$0xff]
    %v1357 = vld [vmem:[%s5] sm:$0x1]
    %v1359 = vlaneseq
    %v1360 = vshrl.u32 %v1359, 7
    %v1361 = vsub.s32 0, %v1360
    %v1362 = vrot.slane %v1357, %v1361
    %1364 = vmatprep.subr.mxu0 0.0
    %1365 = vmatpush1.msra.mxu0 %v1356
    %1366 = vmatprep.subr.mxu0 0.0
    %1367 = vmatpush1.msra.mxu0 %v1355
    %1368 = vmatprep.subr.mxu0 0.0
    %1369 = vmatpush1.msra.mxu0 %v1354
    %1370 = vmatprep.subr.mxu0 0.0
    %1371 = vmatpush1.msra.mxu0 %v1353
    %1372 = vmatprep.subr.mxu0 0.0
    %1373 = vmatpush1.msra.mxu0 %v1352
    %1374 = vmatprep.subr.mxu0 0.0
    %1375 = vmatpush1.msra.mxu0 %v1351
    %1376 = vmatprep.subr.mxu0 0.0
    %1377 = vmatpush1.msra.mxu0 %v1350
    %1378 = vmatprep.subr.mxu0 0.0
    %1379 = vmatpush1.msra.mxu0 %v1349
    %1380 = vmatprep.subr.mxu0 0.0
    %1381 = vmatpush1.msra.mxu0 %v1348
    %1382 = vmatprep.subr.mxu0 0.0
    %1383 = vmatpush1.msra.mxu0 %v1347
    %1384 = vmatprep.subr.mxu0 0.0
    %1385 = vmatpush1.msra.mxu0 %v1346
    %1386 = vmatprep.subr.mxu0 0.0
    %1387 = vmatpush1.msra.mxu0 %v1345
    %1388 = vmatprep.subr.mxu0 0.0
    %1389 = vmatpush1.msra.mxu0 %v1344
    %1390 = vmatprep.subr.mxu0 0.0
    %1391 = vmatpush1.msra.mxu0 %v1343
    %1392 = vmatprep.subr.mxu0 0.0
    %1393 = vmatpush1.msra.mxu0 %v1342
    %1394 = vmatprep.subr.mxu0 0.0
    %1395 = vmatpush1.msra.mxu0 %v1341
    %1396 = vmatprep.subr.mxu0 0.0
    %1397 = vmatpush2.msra.mxu0 0.0
    %1398 = vmatprep.subr.mxu0 0.0
    %1399 = vmatpush2.msra.mxu0 0.0
    %1400 = vmatprep.subr.mxu0 0.0
    %1401 = vmatpush2.msra.mxu0 0.0
    %1402 = vmatprep.subr.mxu0 0.0
    %1403 = vmatpush2.msra.mxu0 0.0
    %1404 = vmatprep.subr.mxu0 0.0
    %1405 = vmatpush2.msra.mxu0 0.0
    %1406 = vmatprep.subr.mxu0 0.0
    %1407 = vmatpush2.msra.mxu0 0.0
    %1408 = vmatprep.subr.mxu0 0.0
    %1409 = vmatpush2.msra.mxu0 0.0
    %1410 = vmatprep.subr.mxu0 0.0
    %1411 = vmatpush2.msra.mxu0 0.0
    %1412 = vmatprep.subr.mxu0 0.0
    %1413 = vmatpush2.msra.mxu0 0.0
    %1414 = vmatprep.subr.mxu0 0.0
    %1415 = vmatpush2.msra.mxu0 0.0
    %1416 = vmatprep.subr.mxu0 0.0
    %1417 = vmatpush2.msra.mxu0 0.0
    %1418 = vmatprep.subr.mxu0 0.0
    %1419 = vmatpush2.msra.mxu0 0.0
    %1420 = vmatprep.subr.mxu0 0.0
    %1421 = vmatpush2.msra.mxu0 0.0
    %1422 = vmatprep.subr.mxu0 0.0
    %1423 = vmatpush2.msra.mxu0 0.0
    %1424 = vmatprep.subr.mxu0 0.0
    %1425 = vmatpush2.msra.mxu0 0.0
    %1426 = vmatprep.subr.mxu0 0.0
    %1427 = vmatpush2.msra.mxu0 0.0
    %1428 = vmatprep.mubr.f32.mxu0 0.0
    %1429 = vmatmul.mubr.f32.gmra.mxu0 %v1335
    %v1430 = vpop.f32.mrf.mxu0
    %v1431 = vadd.f32 %v1362, %v1430
    %v1432 = vpop.f32.mrf.mxu0
    %1433 = vdwg.mxu0
    %1434 = vst [vmem:[%s6] sm:$0xff] %v1431
  $region33: #{lstm_model_forward.1} parent=0 // pred_fallthru
    _
  // Predicated region
  $region34: #{lstm_model_forward.1} parent=0 // pred_check
    _
  $region35: #{lstm_model_forward.1} parent=0 // pred_check_branch
    %1436 = sbr.rel (0) target = $region37
  $region36: #{lstm_model_forward.1} parent=0 // pred_region
    _
  $region37: #{lstm_model_forward.1} parent=0 // pred_fallthru
    _
  // Predicated region
  $region38: #{lstm_model_forward.1} parent=0 // pred_check
    _
  $region39: #{lstm_model_forward.1} parent=0 // pred_check_branch
    %1438 = sbr.rel (0) target = $region41
  $region40: #{lstm_model_forward.1} parent=0 // pred_region
    _
  $region41: #{lstm_model_forward.1} parent=0 // pred_fallthru
    _

</llo_original>
